<compile_context>
chip_gen: v5e
topology: v5e:2x2
jax: 0.10.0
libtpu: 0.0.40
codegen_flags: <defaults>
</compile_context>

<pallas_src>
import jax
import jax.numpy as jnp
import numpy as np
from jax.experimental import pallas as pl
from jax.experimental.pallas import tpu as pltpu

NUM_LAYERS = 2


def _encoder_kernel(x_ref, w0_ref, b0_ref, w1_ref, b1_ref,
                    h_out_ref, c_out_ref):
    """Fused, layer-interleaved 2-layer LSTM encoder.  Single grid step.

    x_ref : (T, B, I)      time-major input
    w0_ref: (I + 4H, 4H)   [Wih0^T ; Whh0^T zero-padded to 4H rows], gates [i,f,o,g]
    b0_ref: (1, 4H)        b_ih0 + b_hh0, gates [i,f,o,g]
    w1_ref: (8H, 4H)       [Wih1^T padded ; Whh1^T padded], gates [i,f,o,g]
    b1_ref: (1, 4H)
    h_out_ref/c_out_ref: (NUM_LAYERS, B, H) final states
    """
    T, B, _ = x_ref.shape
    H4 = w1_ref.shape[1]
    H = H4 // 4

    w0 = w0_ref[...]
    b0 = b0_ref[...]
    w1 = w1_ref[...]
    b1 = b1_ref[...]

    # Hoisted lane mask: sigmoid on [i|f|o] lanes (< 3H), tanh on g lanes.
    lane = jax.lax.broadcasted_iota(jnp.int32, (B, H4), 1)
    is_sig = lane < 3 * H

    def cell_update(gates, c):
        # Full-vreg activations (EUP) + select; no 32-lane gate slices.
        act = jnp.where(is_sig, jax.nn.sigmoid(gates), jnp.tanh(gates))
        # Align f / o / g blocks onto block 0 with XLU rotations.
        g_al = pltpu.roll(act, shift=H, axis=1)       # block0 <- tanh(g)
        o_al = pltpu.roll(act, shift=2 * H, axis=1)   # block0 <- sigma(o)
        f_al = pltpu.roll(act, shift=3 * H, axis=1)   # block0 <- sigma(f)
        # Full-width VPU math; only lanes [0, H) are meaningful (and only those
        # lanes ever feed nonzero weight rows / the final output slice).
        c_new = f_al * c + act * g_al                 # act block0 = sigma(i)
        h_new = o_al * jnp.tanh(c_new)
        return h_new, c_new

    zeros = jnp.zeros((B, H4), jnp.float32)
    h0, c0, h1, c1 = zeros, zeros, zeros, zeros

    # T is small & static: full unroll.  Layers are interleaved per timestep so
    # layer-1 work overlaps layer-0's sequential h->h dependency chain.
    for t in range(T):
        # ---- layer 0: one concat-K matmul [x_t | h0] @ [Wih0 ; Whh0_pad] ----
        lhs0 = jnp.concatenate([x_ref[t], h0], axis=1)           # (B, I+4H)
        gates0 = jnp.dot(lhs0, w0, preferred_element_type=jnp.float32) + b0
        h0, c0 = cell_update(gates0, c0)

        # ---- layer 1: one concat-K matmul [h0 | h1] @ [Wih1_pad ; Whh1_pad] --
        lhs1 = jnp.concatenate([h0, h1], axis=1)                 # (B, 8H)
        gates1 = jnp.dot(lhs1, w1, preferred_element_type=jnp.float32) + b1
        h1, c1 = cell_update(gates1, c1)

    # Single writeback of final states (Encoder only returns (hidden, cell)).
    h_out_ref[0] = h0[:, :H].astype(h_out_ref.dtype)
    h_out_ref[1] = h1[:, :H].astype(h_out_ref.dtype)
    c_out_ref[0] = c0[:, :H].astype(c_out_ref.dtype)
    c_out_ref[1] = c1[:, :H].astype(c_out_ref.dtype)


def prepare_encoder_params(params):
    """One-time parameter prep (do NOT call per forward).

    Reorders gate blocks (i,f,g,o) -> (i,f,o,g), transposes weights to
    (in, 4H), folds the two biases into one (1, 4H) row, zero-pads the
    recurrent (H, 4H) blocks to (4H, 4H) rows (so the full-width carried h
    contributes exactly zero from its unused lanes), and stacks the per-layer
    [input ; hidden] weights for the per-step concat-K matmul.
    """
    (w_ih0, w_hh0, b_ih0, b_hh0), (w_ih1, w_hh1, b_ih1, b_hh1) = params
    H = w_hh0.shape[1]
    perm = jnp.concatenate([
        jnp.arange(0 * H, 1 * H),   # i
        jnp.arange(1 * H, 2 * H),   # f
        jnp.arange(3 * H, 4 * H),   # o
        jnp.arange(2 * H, 3 * H),   # g
    ])

    def prep_layer(w_ih, w_hh, b_ih, b_hh):
        wih_t = jnp.transpose(w_ih[perm]).astype(jnp.float32)      # (in, 4H)
        whh_t = jnp.transpose(w_hh[perm]).astype(jnp.float32)      # (H, 4H)
        bias = (b_ih + b_hh)[perm].reshape(1, 4 * H).astype(jnp.float32)
        return wih_t, whh_t, bias

    def pad_to_4h_rows(w):                                          # (H,4H)->(4H,4H)
        return jnp.concatenate(
            [w, jnp.zeros((3 * H, 4 * H), jnp.float32)], axis=0)

    wih0, whh0, b0 = prep_layer(w_ih0, w_hh0, b_ih0, b_hh0)
    wih1, whh1, b1 = prep_layer(w_ih1, w_hh1, b_ih1, b_hh1)

    w0 = jnp.concatenate([wih0, pad_to_4h_rows(whh0)], axis=0)      # (I+4H, 4H)
    w1 = jnp.concatenate([pad_to_4h_rows(wih1),
                          pad_to_4h_rows(whh1)], axis=0)            # (8H, 4H)
    return w0, b0, w1, b1


@jax.jit
def encoder_forward(x_bti, prepped):
    """Full Encoder forward.  x_bti: (B, T, input_size), batch_first.

    Returns (hidden, cell), each (NUM_LAYERS, B, hidden_size) — matching
    torch.nn.LSTM's return convention.
    """
    w0, b0, w1, b1 = prepped
    B, T, I = x_bti.shape
    H = w1.shape[1] // 4

    # time-major so per-step reads inside the kernel are leading-dim indexed
    x_tbi = jnp.transpose(x_bti, (1, 0, 2))                         # (T, B, I)

    out_shapes = (
        jax.ShapeDtypeStruct((NUM_LAYERS, B, H), jnp.float32),      # hidden
        jax.ShapeDtypeStruct((NUM_LAYERS, B, H), jnp.float32),      # cell
    )

    grid_spec = pltpu.PrefetchScalarGridSpec(
        num_scalar_prefetch=0,
        grid=(1,),
        in_specs=[
            pl.BlockSpec((T, B, I), lambda i: (0, 0, 0)),           # x (time-major)
            pl.BlockSpec(w0.shape, lambda i: (0, 0)),               # stacked W layer0
            pl.BlockSpec((1, 4 * H), lambda i: (0, 0)),             # bias0
            pl.BlockSpec(w1.shape, lambda i: (0, 0)),               # stacked W layer1
            pl.BlockSpec((1, 4 * H), lambda i: (0, 0)),             # bias1
        ],
        out_specs=[
            pl.BlockSpec((NUM_LAYERS, B, H), lambda i: (0, 0, 0)),
            pl.BlockSpec((NUM_LAYERS, B, H), lambda i: (0, 0, 0)),
        ],
    )

    hidden, cell = pl.pallas_call(
        _encoder_kernel,
        out_shape=out_shapes,
        grid_spec=grid_spec,
        compiler_params=pltpu.CompilerParams(
            dimension_semantics=("arbitrary",),
            vmem_limit_bytes=32 * 1024 * 1024,   # explicit VMEM budget guard
        ),
    )(x_tbi, w0, b0, w1, b1)
    return hidden, cell


def init_lstm_params(key, input_size, hidden_size, num_layers):
    """Deterministic init matching PyTorch shapes: U(-1/sqrt(H), 1/sqrt(H))."""
    params = []
    k = 1.0 / np.sqrt(hidden_size)
    for layer in range(num_layers):
        in_sz = input_size if layer == 0 else hidden_size
        key, k1, k2, k3, k4 = jax.random.split(key, 5)
        w_ih = jax.random.uniform(k1, (4 * hidden_size, in_sz), jnp.float32, -k, k)
        w_hh = jax.random.uniform(k2, (4 * hidden_size, hidden_size), jnp.float32, -k, k)
        b_ih = jax.random.uniform(k3, (4 * hidden_size,), jnp.float32, -k, k)
        b_hh = jax.random.uniform(k4, (4 * hidden_size,), jnp.float32, -k, k)
        params.append((w_ih, w_hh, b_ih, b_hh))
    return params


def _reference_forward(x_bti, params):
    """Pure-JAX LSTM reference (lax.scan) on the original PyTorch-layout params."""
    x_tbi = jnp.transpose(x_bti, (1, 0, 2))
    hiddens, cells = [], []
    layer_in = x_tbi
    for (w_ih, w_hh, b_ih, b_hh) in params:
        H = w_hh.shape[1]
        B = layer_in.shape[1]

        def step(carry, x_t):
            h, c = carry
            gates = x_t @ w_ih.T + b_ih + h @ w_hh.T + b_hh
            i = jax.nn.sigmoid(gates[:, 0 * H:1 * H])
            f = jax.nn.sigmoid(gates[:, 1 * H:2 * H])
            g = jnp.tanh(gates[:, 2 * H:3 * H])
            o = jax.nn.sigmoid(gates[:, 3 * H:4 * H])
            c_new = f * c + i * g
            h_new = o * jnp.tanh(c_new)
            return (h_new, c_new), h_new

        init = (jnp.zeros((B, H), jnp.float32), jnp.zeros((B, H), jnp.float32))
        (h_T, c_T), y = jax.lax.scan(step, init, layer_in)
        hiddens.append(h_T)
        cells.append(c_T)
        layer_in = y
    return jnp.stack(hiddens, 0), jnp.stack(cells, 0)


if __name__ == "__main__":
    # Small shapes consistent with the module: (batch=2, seq=8, input_size=32),
    # hidden_size=32, num_layers=2.
    batch, seq, input_size, hidden_size = 2, 8, 32, 32

    key = jax.random.PRNGKey(0)
    key, kx = jax.random.split(key)
    x = jax.random.normal(kx, (batch, seq, input_size), dtype=jnp.float32)

    params = init_lstm_params(key, input_size, hidden_size, NUM_LAYERS)
    prepped = prepare_encoder_params(params)   # one-time prep (not per forward)

    hidden, cell = encoder_forward(x, prepped)
    hidden = jax.block_until_ready(hidden)
    cell = jax.block_until_ready(cell)

    # Sanity check against a pure-JAX reference.
    ref_h, ref_c = _reference_forward(x, params)
    np.testing.assert_allclose(np.asarray(hidden), np.asarray(ref_h),
                               rtol=1e-5, atol=1e-5)
    np.testing.assert_allclose(np.asarray(cell), np.asarray(ref_c),
                               rtol=1e-5, atol=1e-5)

    assert hidden.shape == (NUM_LAYERS, batch, hidden_size)
    assert cell.shape == (NUM_LAYERS, batch, hidden_size)
    print("KERNEL_OK")
</pallas_src>

<mosaic_0001>
module attributes {stable_mosaic.version = 11 : i64} {
  func.func @_encoder_kernel(%arg0: i32, %arg1: memref<8x2x32xf32, #tpu.memory_space<vmem>>, %arg2: memref<160x128xf32, #tpu.memory_space<vmem>>, %arg3: memref<1x128xf32, #tpu.memory_space<vmem>>, %arg4: memref<256x128xf32, #tpu.memory_space<vmem>>, %arg5: memref<1x128xf32, #tpu.memory_space<vmem>>, %arg6: memref<2x2x32xf32, #tpu.memory_space<vmem>>, %arg7: memref<2x2x32xf32, #tpu.memory_space<vmem>>) attributes {dimension_semantics = [#tpu.dimension_semantics<arbitrary>], iteration_bounds = array<i64: 1>, scalar_prefetch = 0 : i64, scratch_operands = 0 : i64, tpu.core_type = #tpu.core_type<tc>, window_params = [{pipeline_mode = #tpu.pipeline_mode<synchronous>, transform_indices = @transform_0, window_bounds = array<i64: 8, 2, 32>}, {pipeline_mode = #tpu.pipeline_mode<synchronous>, transform_indices = @transform_1, window_bounds = array<i64: 160, 128>}, {pipeline_mode = #tpu.pipeline_mode<synchronous>, transform_indices = @transform_2, window_bounds = array<i64: 1, 128>}, {pipeline_mode = #tpu.pipeline_mode<synchronous>, transform_indices = @transform_3, window_bounds = array<i64: 256, 128>}, {pipeline_mode = #tpu.pipeline_mode<synchronous>, transform_indices = @transform_4, window_bounds = array<i64: 1, 128>}, {pipeline_mode = #tpu.pipeline_mode<synchronous>, transform_indices = @transform_5, window_bounds = array<i64: 2, 2, 32>}, {pipeline_mode = #tpu.pipeline_mode<synchronous>, transform_indices = @transform_6, window_bounds = array<i64: 2, 2, 32>}]} {
    %c0 = arith.constant 0 : index
    %c0_0 = arith.constant 0 : index
    %0 = vector.load %arg2[%c0, %c0_0] : memref<160x128xf32, #tpu.memory_space<vmem>>, vector<160x128xf32>
    %c0_1 = arith.constant 0 : index
    %c0_2 = arith.constant 0 : index
    %1 = vector.load %arg3[%c0_1, %c0_2] : memref<1x128xf32, #tpu.memory_space<vmem>>, vector<1x128xf32>
    %c0_3 = arith.constant 0 : index
    %c0_4 = arith.constant 0 : index
    %2 = vector.load %arg4[%c0_3, %c0_4] : memref<256x128xf32, #tpu.memory_space<vmem>>, vector<256x128xf32>
    %c0_5 = arith.constant 0 : index
    %c0_6 = arith.constant 0 : index
    %3 = vector.load %arg5[%c0_5, %c0_6] : memref<1x128xf32, #tpu.memory_space<vmem>>, vector<1x128xf32>
    %4 = tpu.iota {dimensions = array<i32: 1>} : vector<2x128xi32>
    %c96_i32 = arith.constant 96 : i32
    %5 = vector.broadcast %c96_i32 : i32 to vector<2x128xi32>
    %6 = arith.cmpi slt, %4, %5 : vector<2x128xi32>
    %cst = arith.constant 0.000000e+00 : f32
    %7 = vector.broadcast %cst : f32 to vector<2x128xf32>
    %c0_7 = arith.constant 0 : index
    %c0_8 = arith.constant 0 : index
    %c0_9 = arith.constant 0 : index
    %8 = vector.load %arg1[%c0_7, %c0_8, %c0_9] : memref<8x2x32xf32, #tpu.memory_space<vmem>>, vector<1x2x32xf32>
    %9 = vector.shape_cast %8 : vector<1x2x32xf32> to vector<2x32xf32>
    %10 = tpu.concatenate %9, %7 in 1 : vector<2x32xf32>, vector<2x128xf32> -> vector<2x160xf32>
    %cst_10 = arith.constant dense<0.000000e+00> : vector<2x128xf32>
    %11 = tpu.matmul %10, %0, %cst_10 {dimension_numbers = #tpu.dot_dimension_numbers<[1], [0], [0], [1], [0, 0, 1, 1], [], []>} : vector<2x160xf32>, vector<160x128xf32>, vector<2x128xf32> -> vector<2x128xf32>
    %12 = vector.broadcast %1 : vector<1x128xf32> to vector<2x128xf32>
    %13 = arith.addf %11, %12 : vector<2x128xf32>
    %14 = arith.negf %13 : vector<2x128xf32>
    %15 = math.exp %14 : vector<2x128xf32>
    %cst_11 = arith.constant 1.000000e+00 : f32
    %16 = vector.broadcast %cst_11 : f32 to vector<2x128xf32>
    %17 = arith.addf %16, %15 : vector<2x128xf32>
    %18 = arith.divf %16, %17 : vector<2x128xf32>
    %19 = math.tanh %13 : vector<2x128xf32>
    %20 = arith.select %6, %18, %19 : vector<2x128xi1>, vector<2x128xf32>
    %c32_i32 = arith.constant 32 : i32
    %21 = tpu.dynamic_rotate %20 by %c32_i32 dim 1 : vector<2x128xf32>, i32 -> vector<2x128xf32>
    %c64_i32 = arith.constant 64 : i32
    %22 = tpu.dynamic_rotate %20 by %c64_i32 dim 1 : vector<2x128xf32>, i32 -> vector<2x128xf32>
    %c96_i32_12 = arith.constant 96 : i32
    %23 = tpu.dynamic_rotate %20 by %c96_i32_12 dim 1 : vector<2x128xf32>, i32 -> vector<2x128xf32>
    %24 = arith.mulf %23, %7 : vector<2x128xf32>
    %25 = arith.mulf %20, %21 : vector<2x128xf32>
    %26 = arith.addf %24, %25 : vector<2x128xf32>
    %27 = math.tanh %26 : vector<2x128xf32>
    %28 = arith.mulf %22, %27 : vector<2x128xf32>
    %29 = tpu.concatenate %28, %7 in 1 : vector<2x128xf32>, vector<2x128xf32> -> vector<2x256xf32>
    %cst_13 = arith.constant dense<0.000000e+00> : vector<2x128xf32>
    %30 = tpu.matmul %29, %2, %cst_13 {dimension_numbers = #tpu.dot_dimension_numbers<[1], [0], [0], [1], [0, 0, 1, 1], [], []>} : vector<2x256xf32>, vector<256x128xf32>, vector<2x128xf32> -> vector<2x128xf32>
    %31 = vector.broadcast %3 : vector<1x128xf32> to vector<2x128xf32>
    %32 = arith.addf %30, %31 : vector<2x128xf32>
    %33 = arith.negf %32 : vector<2x128xf32>
    %34 = math.exp %33 : vector<2x128xf32>
    %cst_14 = arith.constant 1.000000e+00 : f32
    %35 = vector.broadcast %cst_14 : f32 to vector<2x128xf32>
    %36 = arith.addf %35, %34 : vector<2x128xf32>
    %37 = arith.divf %35, %36 : vector<2x128xf32>
    %38 = math.tanh %32 : vector<2x128xf32>
    %39 = arith.select %6, %37, %38 : vector<2x128xi1>, vector<2x128xf32>
    %c32_i32_15 = arith.constant 32 : i32
    %40 = tpu.dynamic_rotate %39 by %c32_i32_15 dim 1 : vector<2x128xf32>, i32 -> vector<2x128xf32>
    %c64_i32_16 = arith.constant 64 : i32
    %41 = tpu.dynamic_rotate %39 by %c64_i32_16 dim 1 : vector<2x128xf32>, i32 -> vector<2x128xf32>
    %c96_i32_17 = arith.constant 96 : i32
    %42 = tpu.dynamic_rotate %39 by %c96_i32_17 dim 1 : vector<2x128xf32>, i32 -> vector<2x128xf32>
    %43 = arith.mulf %42, %7 : vector<2x128xf32>
    %44 = arith.mulf %39, %40 : vector<2x128xf32>
    %45 = arith.addf %43, %44 : vector<2x128xf32>
    %46 = math.tanh %45 : vector<2x128xf32>
    %47 = arith.mulf %41, %46 : vector<2x128xf32>
    %c1 = arith.constant 1 : index
    %c0_18 = arith.constant 0 : index
    %c0_19 = arith.constant 0 : index
    %48 = vector.load %arg1[%c1, %c0_18, %c0_19] : memref<8x2x32xf32, #tpu.memory_space<vmem>>, vector<1x2x32xf32>
    %49 = vector.shape_cast %48 : vector<1x2x32xf32> to vector<2x32xf32>
    %50 = tpu.concatenate %49, %28 in 1 : vector<2x32xf32>, vector<2x128xf32> -> vector<2x160xf32>
    %cst_20 = arith.constant dense<0.000000e+00> : vector<2x128xf32>
    %51 = tpu.matmul %50, %0, %cst_20 {dimension_numbers = #tpu.dot_dimension_numbers<[1], [0], [0], [1], [0, 0, 1, 1], [], []>} : vector<2x160xf32>, vector<160x128xf32>, vector<2x128xf32> -> vector<2x128xf32>
    %52 = vector.broadcast %1 : vector<1x128xf32> to vector<2x128xf32>
    %53 = arith.addf %51, %52 : vector<2x128xf32>
    %54 = arith.negf %53 : vector<2x128xf32>
    %55 = math.exp %54 : vector<2x128xf32>
    %cst_21 = arith.constant 1.000000e+00 : f32
    %56 = vector.broadcast %cst_21 : f32 to vector<2x128xf32>
    %57 = arith.addf %56, %55 : vector<2x128xf32>
    %58 = arith.divf %56, %57 : vector<2x128xf32>
    %59 = math.tanh %53 : vector<2x128xf32>
    %60 = arith.select %6, %58, %59 : vector<2x128xi1>, vector<2x128xf32>
    %c32_i32_22 = arith.constant 32 : i32
    %61 = tpu.dynamic_rotate %60 by %c32_i32_22 dim 1 : vector<2x128xf32>, i32 -> vector<2x128xf32>
    %c64_i32_23 = arith.constant 64 : i32
    %62 = tpu.dynamic_rotate %60 by %c64_i32_23 dim 1 : vector<2x128xf32>, i32 -> vector<2x128xf32>
    %c96_i32_24 = arith.constant 96 : i32
    %63 = tpu.dynamic_rotate %60 by %c96_i32_24 dim 1 : vector<2x128xf32>, i32 -> vector<2x128xf32>
    %64 = arith.mulf %63, %26 : vector<2x128xf32>
    %65 = arith.mulf %60, %61 : vector<2x128xf32>
    %66 = arith.addf %64, %65 : vector<2x128xf32>
    %67 = math.tanh %66 : vector<2x128xf32>
    %68 = arith.mulf %62, %67 : vector<2x128xf32>
    %69 = tpu.concatenate %68, %47 in 1 : vector<2x128xf32>, vector<2x128xf32> -> vector<2x256xf32>
    %cst_25 = arith.constant dense<0.000000e+00> : vector<2x128xf32>
    %70 = tpu.matmul %69, %2, %cst_25 {dimension_numbers = #tpu.dot_dimension_numbers<[1], [0], [0], [1], [0, 0, 1, 1], [], []>} : vector<2x256xf32>, vector<256x128xf32>, vector<2x128xf32> -> vector<2x128xf32>
    %71 = vector.broadcast %3 : vector<1x128xf32> to vector<2x128xf32>
    %72 = arith.addf %70, %71 : vector<2x128xf32>
    %73 = arith.negf %72 : vector<2x128xf32>
    %74 = math.exp %73 : vector<2x128xf32>
    %cst_26 = arith.constant 1.000000e+00 : f32
    %75 = vector.broadcast %cst_26 : f32 to vector<2x128xf32>
    %76 = arith.addf %75, %74 : vector<2x128xf32>
    %77 = arith.divf %75, %76 : vector<2x128xf32>
    %78 = math.tanh %72 : vector<2x128xf32>
    %79 = arith.select %6, %77, %78 : vector<2x128xi1>, vector<2x128xf32>
    %c32_i32_27 = arith.constant 32 : i32
    %80 = tpu.dynamic_rotate %79 by %c32_i32_27 dim 1 : vector<2x128xf32>, i32 -> vector<2x128xf32>
    %c64_i32_28 = arith.constant 64 : i32
    %81 = tpu.dynamic_rotate %79 by %c64_i32_28 dim 1 : vector<2x128xf32>, i32 -> vector<2x128xf32>
    %c96_i32_29 = arith.constant 96 : i32
    %82 = tpu.dynamic_rotate %79 by %c96_i32_29 dim 1 : vector<2x128xf32>, i32 -> vector<2x128xf32>
    %83 = arith.mulf %82, %45 : vector<2x128xf32>
    %84 = arith.mulf %79, %80 : vector<2x128xf32>
    %85 = arith.addf %83, %84 : vector<2x128xf32>
    %86 = math.tanh %85 : vector<2x128xf32>
    %87 = arith.mulf %81, %86 : vector<2x128xf32>
    %c2 = arith.constant 2 : index
    %c0_30 = arith.constant 0 : index
    %c0_31 = arith.constant 0 : index
    %88 = vector.load %arg1[%c2, %c0_30, %c0_31] : memref<8x2x32xf32, #tpu.memory_space<vmem>>, vector<1x2x32xf32>
    %89 = vector.shape_cast %88 : vector<1x2x32xf32> to vector<2x32xf32>
    %90 = tpu.concatenate %89, %68 in 1 : vector<2x32xf32>, vector<2x128xf32> -> vector<2x160xf32>
    %cst_32 = arith.constant dense<0.000000e+00> : vector<2x128xf32>
    %91 = tpu.matmul %90, %0, %cst_32 {dimension_numbers = #tpu.dot_dimension_numbers<[1], [0], [0], [1], [0, 0, 1, 1], [], []>} : vector<2x160xf32>, vector<160x128xf32>, vector<2x128xf32> -> vector<2x128xf32>
    %92 = vector.broadcast %1 : vector<1x128xf32> to vector<2x128xf32>
    %93 = arith.addf %91, %92 : vector<2x128xf32>
    %94 = arith.negf %93 : vector<2x128xf32>
    %95 = math.exp %94 : vector<2x128xf32>
    %cst_33 = arith.constant 1.000000e+00 : f32
    %96 = vector.broadcast %cst_33 : f32 to vector<2x128xf32>
    %97 = arith.addf %96, %95 : vector<2x128xf32>
    %98 = arith.divf %96, %97 : vector<2x128xf32>
    %99 = math.tanh %93 : vector<2x128xf32>
    %100 = arith.select %6, %98, %99 : vector<2x128xi1>, vector<2x128xf32>
    %c32_i32_34 = arith.constant 32 : i32
    %101 = tpu.dynamic_rotate %100 by %c32_i32_34 dim 1 : vector<2x128xf32>, i32 -> vector<2x128xf32>
    %c64_i32_35 = arith.constant 64 : i32
    %102 = tpu.dynamic_rotate %100 by %c64_i32_35 dim 1 : vector<2x128xf32>, i32 -> vector<2x128xf32>
    %c96_i32_36 = arith.constant 96 : i32
    %103 = tpu.dynamic_rotate %100 by %c96_i32_36 dim 1 : vector<2x128xf32>, i32 -> vector<2x128xf32>
    %104 = arith.mulf %103, %66 : vector<2x128xf32>
    %105 = arith.mulf %100, %101 : vector<2x128xf32>
    %106 = arith.addf %104, %105 : vector<2x128xf32>
    %107 = math.tanh %106 : vector<2x128xf32>
    %108 = arith.mulf %102, %107 : vector<2x128xf32>
    %109 = tpu.concatenate %108, %87 in 1 : vector<2x128xf32>, vector<2x128xf32> -> vector<2x256xf32>
    %cst_37 = arith.constant dense<0.000000e+00> : vector<2x128xf32>
    %110 = tpu.matmul %109, %2, %cst_37 {dimension_numbers = #tpu.dot_dimension_numbers<[1], [0], [0], [1], [0, 0, 1, 1], [], []>} : vector<2x256xf32>, vector<256x128xf32>, vector<2x128xf32> -> vector<2x128xf32>
    %111 = vector.broadcast %3 : vector<1x128xf32> to vector<2x128xf32>
    %112 = arith.addf %110, %111 : vector<2x128xf32>
    %113 = arith.negf %112 : vector<2x128xf32>
    %114 = math.exp %113 : vector<2x128xf32>
    %cst_38 = arith.constant 1.000000e+00 : f32
    %115 = vector.broadcast %cst_38 : f32 to vector<2x128xf32>
    %116 = arith.addf %115, %114 : vector<2x128xf32>
    %117 = arith.divf %115, %116 : vector<2x128xf32>
    %118 = math.tanh %112 : vector<2x128xf32>
    %119 = arith.select %6, %117, %118 : vector<2x128xi1>, vector<2x128xf32>
    %c32_i32_39 = arith.constant 32 : i32
    %120 = tpu.dynamic_rotate %119 by %c32_i32_39 dim 1 : vector<2x128xf32>, i32 -> vector<2x128xf32>
    %c64_i32_40 = arith.constant 64 : i32
    %121 = tpu.dynamic_rotate %119 by %c64_i32_40 dim 1 : vector<2x128xf32>, i32 -> vector<2x128xf32>
    %c96_i32_41 = arith.constant 96 : i32
    %122 = tpu.dynamic_rotate %119 by %c96_i32_41 dim 1 : vector<2x128xf32>, i32 -> vector<2x128xf32>
    %123 = arith.mulf %122, %85 : vector<2x128xf32>
    %124 = arith.mulf %119, %120 : vector<2x128xf32>
    %125 = arith.addf %123, %124 : vector<2x128xf32>
    %126 = math.tanh %125 : vector<2x128xf32>
    %127 = arith.mulf %121, %126 : vector<2x128xf32>
    %c3 = arith.constant 3 : index
    %c0_42 = arith.constant 0 : index
    %c0_43 = arith.constant 0 : index
    %128 = vector.load %arg1[%c3, %c0_42, %c0_43] : memref<8x2x32xf32, #tpu.memory_space<vmem>>, vector<1x2x32xf32>
    %129 = vector.shape_cast %128 : vector<1x2x32xf32> to vector<2x32xf32>
    %130 = tpu.concatenate %129, %108 in 1 : vector<2x32xf32>, vector<2x128xf32> -> vector<2x160xf32>
    %cst_44 = arith.constant dense<0.000000e+00> : vector<2x128xf32>
    %131 = tpu.matmul %130, %0, %cst_44 {dimension_numbers = #tpu.dot_dimension_numbers<[1], [0], [0], [1], [0, 0, 1, 1], [], []>} : vector<2x160xf32>, vector<160x128xf32>, vector<2x128xf32> -> vector<2x128xf32>
    %132 = vector.broadcast %1 : vector<1x128xf32> to vector<2x128xf32>
    %133 = arith.addf %131, %132 : vector<2x128xf32>
    %134 = arith.negf %133 : vector<2x128xf32>
    %135 = math.exp %134 : vector<2x128xf32>
    %cst_45 = arith.constant 1.000000e+00 : f32
    %136 = vector.broadcast %cst_45 : f32 to vector<2x128xf32>
    %137 = arith.addf %136, %135 : vector<2x128xf32>
    %138 = arith.divf %136, %137 : vector<2x128xf32>
    %139 = math.tanh %133 : vector<2x128xf32>
    %140 = arith.select %6, %138, %139 : vector<2x128xi1>, vector<2x128xf32>
    %c32_i32_46 = arith.constant 32 : i32
    %141 = tpu.dynamic_rotate %140 by %c32_i32_46 dim 1 : vector<2x128xf32>, i32 -> vector<2x128xf32>
    %c64_i32_47 = arith.constant 64 : i32
    %142 = tpu.dynamic_rotate %140 by %c64_i32_47 dim 1 : vector<2x128xf32>, i32 -> vector<2x128xf32>
    %c96_i32_48 = arith.constant 96 : i32
    %143 = tpu.dynamic_rotate %140 by %c96_i32_48 dim 1 : vector<2x128xf32>, i32 -> vector<2x128xf32>
    %144 = arith.mulf %143, %106 : vector<2x128xf32>
    %145 = arith.mulf %140, %141 : vector<2x128xf32>
    %146 = arith.addf %144, %145 : vector<2x128xf32>
    %147 = math.tanh %146 : vector<2x128xf32>
    %148 = arith.mulf %142, %147 : vector<2x128xf32>
    %149 = tpu.concatenate %148, %127 in 1 : vector<2x128xf32>, vector<2x128xf32> -> vector<2x256xf32>
    %cst_49 = arith.constant dense<0.000000e+00> : vector<2x128xf32>
    %150 = tpu.matmul %149, %2, %cst_49 {dimension_numbers = #tpu.dot_dimension_numbers<[1], [0], [0], [1], [0, 0, 1, 1], [], []>} : vector<2x256xf32>, vector<256x128xf32>, vector<2x128xf32> -> vector<2x128xf32>
    %151 = vector.broadcast %3 : vector<1x128xf32> to vector<2x128xf32>
    %152 = arith.addf %150, %151 : vector<2x128xf32>
    %153 = arith.negf %152 : vector<2x128xf32>
    %154 = math.exp %153 : vector<2x128xf32>
    %cst_50 = arith.constant 1.000000e+00 : f32
    %155 = vector.broadcast %cst_50 : f32 to vector<2x128xf32>
    %156 = arith.addf %155, %154 : vector<2x128xf32>
    %157 = arith.divf %155, %156 : vector<2x128xf32>
    %158 = math.tanh %152 : vector<2x128xf32>
    %159 = arith.select %6, %157, %158 : vector<2x128xi1>, vector<2x128xf32>
    %c32_i32_51 = arith.constant 32 : i32
    %160 = tpu.dynamic_rotate %159 by %c32_i32_51 dim 1 : vector<2x128xf32>, i32 -> vector<2x128xf32>
    %c64_i32_52 = arith.constant 64 : i32
    %161 = tpu.dynamic_rotate %159 by %c64_i32_52 dim 1 : vector<2x128xf32>, i32 -> vector<2x128xf32>
    %c96_i32_53 = arith.constant 96 : i32
    %162 = tpu.dynamic_rotate %159 by %c96_i32_53 dim 1 : vector<2x128xf32>, i32 -> vector<2x128xf32>
    %163 = arith.mulf %162, %125 : vector<2x128xf32>
    %164 = arith.mulf %159, %160 : vector<2x128xf32>
    %165 = arith.addf %163, %164 : vector<2x128xf32>
    %166 = math.tanh %165 : vector<2x128xf32>
    %167 = arith.mulf %161, %166 : vector<2x128xf32>
    %c4 = arith.constant 4 : index
    %c0_54 = arith.constant 0 : index
    %c0_55 = arith.constant 0 : index
    %168 = vector.load %arg1[%c4, %c0_54, %c0_55] : memref<8x2x32xf32, #tpu.memory_space<vmem>>, vector<1x2x32xf32>
    %169 = vector.shape_cast %168 : vector<1x2x32xf32> to vector<2x32xf32>
    %170 = tpu.concatenate %169, %148 in 1 : vector<2x32xf32>, vector<2x128xf32> -> vector<2x160xf32>
    %cst_56 = arith.constant dense<0.000000e+00> : vector<2x128xf32>
    %171 = tpu.matmul %170, %0, %cst_56 {dimension_numbers = #tpu.dot_dimension_numbers<[1], [0], [0], [1], [0, 0, 1, 1], [], []>} : vector<2x160xf32>, vector<160x128xf32>, vector<2x128xf32> -> vector<2x128xf32>
    %172 = vector.broadcast %1 : vector<1x128xf32> to vector<2x128xf32>
    %173 = arith.addf %171, %172 : vector<2x128xf32>
    %174 = arith.negf %173 : vector<2x128xf32>
    %175 = math.exp %174 : vector<2x128xf32>
    %cst_57 = arith.constant 1.000000e+00 : f32
    %176 = vector.broadcast %cst_57 : f32 to vector<2x128xf32>
    %177 = arith.addf %176, %175 : vector<2x128xf32>
    %178 = arith.divf %176, %177 : vector<2x128xf32>
    %179 = math.tanh %173 : vector<2x128xf32>
    %180 = arith.select %6, %178, %179 : vector<2x128xi1>, vector<2x128xf32>
    %c32_i32_58 = arith.constant 32 : i32
    %181 = tpu.dynamic_rotate %180 by %c32_i32_58 dim 1 : vector<2x128xf32>, i32 -> vector<2x128xf32>
    %c64_i32_59 = arith.constant 64 : i32
    %182 = tpu.dynamic_rotate %180 by %c64_i32_59 dim 1 : vector<2x128xf32>, i32 -> vector<2x128xf32>
    %c96_i32_60 = arith.constant 96 : i32
    %183 = tpu.dynamic_rotate %180 by %c96_i32_60 dim 1 : vector<2x128xf32>, i32 -> vector<2x128xf32>
    %184 = arith.mulf %183, %146 : vector<2x128xf32>
    %185 = arith.mulf %180, %181 : vector<2x128xf32>
    %186 = arith.addf %184, %185 : vector<2x128xf32>
    %187 = math.tanh %186 : vector<2x128xf32>
    %188 = arith.mulf %182, %187 : vector<2x128xf32>
    %189 = tpu.concatenate %188, %167 in 1 : vector<2x128xf32>, vector<2x128xf32> -> vector<2x256xf32>
    %cst_61 = arith.constant dense<0.000000e+00> : vector<2x128xf32>
    %190 = tpu.matmul %189, %2, %cst_61 {dimension_numbers = #tpu.dot_dimension_numbers<[1], [0], [0], [1], [0, 0, 1, 1], [], []>} : vector<2x256xf32>, vector<256x128xf32>, vector<2x128xf32> -> vector<2x128xf32>
    %191 = vector.broadcast %3 : vector<1x128xf32> to vector<2x128xf32>
    %192 = arith.addf %190, %191 : vector<2x128xf32>
    %193 = arith.negf %192 : vector<2x128xf32>
    %194 = math.exp %193 : vector<2x128xf32>
    %cst_62 = arith.constant 1.000000e+00 : f32
    %195 = vector.broadcast %cst_62 : f32 to vector<2x128xf32>
    %196 = arith.addf %195, %194 : vector<2x128xf32>
    %197 = arith.divf %195, %196 : vector<2x128xf32>
    %198 = math.tanh %192 : vector<2x128xf32>
    %199 = arith.select %6, %197, %198 : vector<2x128xi1>, vector<2x128xf32>
    %c32_i32_63 = arith.constant 32 : i32
    %200 = tpu.dynamic_rotate %199 by %c32_i32_63 dim 1 : vector<2x128xf32>, i32 -> vector<2x128xf32>
    %c64_i32_64 = arith.constant 64 : i32
    %201 = tpu.dynamic_rotate %199 by %c64_i32_64 dim 1 : vector<2x128xf32>, i32 -> vector<2x128xf32>
    %c96_i32_65 = arith.constant 96 : i32
    %202 = tpu.dynamic_rotate %199 by %c96_i32_65 dim 1 : vector<2x128xf32>, i32 -> vector<2x128xf32>
    %203 = arith.mulf %202, %165 : vector<2x128xf32>
    %204 = arith.mulf %199, %200 : vector<2x128xf32>
    %205 = arith.addf %203, %204 : vector<2x128xf32>
    %206 = math.tanh %205 : vector<2x128xf32>
    %207 = arith.mulf %201, %206 : vector<2x128xf32>
    %c5 = arith.constant 5 : index
    %c0_66 = arith.constant 0 : index
    %c0_67 = arith.constant 0 : index
    %208 = vector.load %arg1[%c5, %c0_66, %c0_67] : memref<8x2x32xf32, #tpu.memory_space<vmem>>, vector<1x2x32xf32>
    %209 = vector.shape_cast %208 : vector<1x2x32xf32> to vector<2x32xf32>
    %210 = tpu.concatenate %209, %188 in 1 : vector<2x32xf32>, vector<2x128xf32> -> vector<2x160xf32>
    %cst_68 = arith.constant dense<0.000000e+00> : vector<2x128xf32>
    %211 = tpu.matmul %210, %0, %cst_68 {dimension_numbers = #tpu.dot_dimension_numbers<[1], [0], [0], [1], [0, 0, 1, 1], [], []>} : vector<2x160xf32>, vector<160x128xf32>, vector<2x128xf32> -> vector<2x128xf32>
    %212 = vector.broadcast %1 : vector<1x128xf32> to vector<2x128xf32>
    %213 = arith.addf %211, %212 : vector<2x128xf32>
    %214 = arith.negf %213 : vector<2x128xf32>
    %215 = math.exp %214 : vector<2x128xf32>
    %cst_69 = arith.constant 1.000000e+00 : f32
    %216 = vector.broadcast %cst_69 : f32 to vector<2x128xf32>
    %217 = arith.addf %216, %215 : vector<2x128xf32>
    %218 = arith.divf %216, %217 : vector<2x128xf32>
    %219 = math.tanh %213 : vector<2x128xf32>
    %220 = arith.select %6, %218, %219 : vector<2x128xi1>, vector<2x128xf32>
    %c32_i32_70 = arith.constant 32 : i32
    %221 = tpu.dynamic_rotate %220 by %c32_i32_70 dim 1 : vector<2x128xf32>, i32 -> vector<2x128xf32>
    %c64_i32_71 = arith.constant 64 : i32
    %222 = tpu.dynamic_rotate %220 by %c64_i32_71 dim 1 : vector<2x128xf32>, i32 -> vector<2x128xf32>
    %c96_i32_72 = arith.constant 96 : i32
    %223 = tpu.dynamic_rotate %220 by %c96_i32_72 dim 1 : vector<2x128xf32>, i32 -> vector<2x128xf32>
    %224 = arith.mulf %223, %186 : vector<2x128xf32>
    %225 = arith.mulf %220, %221 : vector<2x128xf32>
    %226 = arith.addf %224, %225 : vector<2x128xf32>
    %227 = math.tanh %226 : vector<2x128xf32>
    %228 = arith.mulf %222, %227 : vector<2x128xf32>
    %229 = tpu.concatenate %228, %207 in 1 : vector<2x128xf32>, vector<2x128xf32> -> vector<2x256xf32>
    %cst_73 = arith.constant dense<0.000000e+00> : vector<2x128xf32>
    %230 = tpu.matmul %229, %2, %cst_73 {dimension_numbers = #tpu.dot_dimension_numbers<[1], [0], [0], [1], [0, 0, 1, 1], [], []>} : vector<2x256xf32>, vector<256x128xf32>, vector<2x128xf32> -> vector<2x128xf32>
    %231 = vector.broadcast %3 : vector<1x128xf32> to vector<2x128xf32>
    %232 = arith.addf %230, %231 : vector<2x128xf32>
    %233 = arith.negf %232 : vector<2x128xf32>
    %234 = math.exp %233 : vector<2x128xf32>
    %cst_74 = arith.constant 1.000000e+00 : f32
    %235 = vector.broadcast %cst_74 : f32 to vector<2x128xf32>
    %236 = arith.addf %235, %234 : vector<2x128xf32>
    %237 = arith.divf %235, %236 : vector<2x128xf32>
    %238 = math.tanh %232 : vector<2x128xf32>
    %239 = arith.select %6, %237, %238 : vector<2x128xi1>, vector<2x128xf32>
    %c32_i32_75 = arith.constant 32 : i32
    %240 = tpu.dynamic_rotate %239 by %c32_i32_75 dim 1 : vector<2x128xf32>, i32 -> vector<2x128xf32>
    %c64_i32_76 = arith.constant 64 : i32
    %241 = tpu.dynamic_rotate %239 by %c64_i32_76 dim 1 : vector<2x128xf32>, i32 -> vector<2x128xf32>
    %c96_i32_77 = arith.constant 96 : i32
    %242 = tpu.dynamic_rotate %239 by %c96_i32_77 dim 1 : vector<2x128xf32>, i32 -> vector<2x128xf32>
    %243 = arith.mulf %242, %205 : vector<2x128xf32>
    %244 = arith.mulf %239, %240 : vector<2x128xf32>
    %245 = arith.addf %243, %244 : vector<2x128xf32>
    %246 = math.tanh %245 : vector<2x128xf32>
    %247 = arith.mulf %241, %246 : vector<2x128xf32>
    %c6 = arith.constant 6 : index
    %c0_78 = arith.constant 0 : index
    %c0_79 = arith.constant 0 : index
    %248 = vector.load %arg1[%c6, %c0_78, %c0_79] : memref<8x2x32xf32, #tpu.memory_space<vmem>>, vector<1x2x32xf32>
    %249 = vector.shape_cast %248 : vector<1x2x32xf32> to vector<2x32xf32>
    %250 = tpu.concatenate %249, %228 in 1 : vector<2x32xf32>, vector<2x128xf32> -> vector<2x160xf32>
    %cst_80 = arith.constant dense<0.000000e+00> : vector<2x128xf32>
    %251 = tpu.matmul %250, %0, %cst_80 {dimension_numbers = #tpu.dot_dimension_numbers<[1], [0], [0], [1], [0, 0, 1, 1], [], []>} : vector<2x160xf32>, vector<160x128xf32>, vector<2x128xf32> -> vector<2x128xf32>
    %252 = vector.broadcast %1 : vector<1x128xf32> to vector<2x128xf32>
    %253 = arith.addf %251, %252 : vector<2x128xf32>
    %254 = arith.negf %253 : vector<2x128xf32>
    %255 = math.exp %254 : vector<2x128xf32>
    %cst_81 = arith.constant 1.000000e+00 : f32
    %256 = vector.broadcast %cst_81 : f32 to vector<2x128xf32>
    %257 = arith.addf %256, %255 : vector<2x128xf32>
    %258 = arith.divf %256, %257 : vector<2x128xf32>
    %259 = math.tanh %253 : vector<2x128xf32>
    %260 = arith.select %6, %258, %259 : vector<2x128xi1>, vector<2x128xf32>
    %c32_i32_82 = arith.constant 32 : i32
    %261 = tpu.dynamic_rotate %260 by %c32_i32_82 dim 1 : vector<2x128xf32>, i32 -> vector<2x128xf32>
    %c64_i32_83 = arith.constant 64 : i32
    %262 = tpu.dynamic_rotate %260 by %c64_i32_83 dim 1 : vector<2x128xf32>, i32 -> vector<2x128xf32>
    %c96_i32_84 = arith.constant 96 : i32
    %263 = tpu.dynamic_rotate %260 by %c96_i32_84 dim 1 : vector<2x128xf32>, i32 -> vector<2x128xf32>
    %264 = arith.mulf %263, %226 : vector<2x128xf32>
    %265 = arith.mulf %260, %261 : vector<2x128xf32>
    %266 = arith.addf %264, %265 : vector<2x128xf32>
    %267 = math.tanh %266 : vector<2x128xf32>
    %268 = arith.mulf %262, %267 : vector<2x128xf32>
    %269 = tpu.concatenate %268, %247 in 1 : vector<2x128xf32>, vector<2x128xf32> -> vector<2x256xf32>
    %cst_85 = arith.constant dense<0.000000e+00> : vector<2x128xf32>
    %270 = tpu.matmul %269, %2, %cst_85 {dimension_numbers = #tpu.dot_dimension_numbers<[1], [0], [0], [1], [0, 0, 1, 1], [], []>} : vector<2x256xf32>, vector<256x128xf32>, vector<2x128xf32> -> vector<2x128xf32>
    %271 = vector.broadcast %3 : vector<1x128xf32> to vector<2x128xf32>
    %272 = arith.addf %270, %271 : vector<2x128xf32>
    %273 = arith.negf %272 : vector<2x128xf32>
    %274 = math.exp %273 : vector<2x128xf32>
    %cst_86 = arith.constant 1.000000e+00 : f32
    %275 = vector.broadcast %cst_86 : f32 to vector<2x128xf32>
    %276 = arith.addf %275, %274 : vector<2x128xf32>
    %277 = arith.divf %275, %276 : vector<2x128xf32>
    %278 = math.tanh %272 : vector<2x128xf32>
    %279 = arith.select %6, %277, %278 : vector<2x128xi1>, vector<2x128xf32>
    %c32_i32_87 = arith.constant 32 : i32
    %280 = tpu.dynamic_rotate %279 by %c32_i32_87 dim 1 : vector<2x128xf32>, i32 -> vector<2x128xf32>
    %c64_i32_88 = arith.constant 64 : i32
    %281 = tpu.dynamic_rotate %279 by %c64_i32_88 dim 1 : vector<2x128xf32>, i32 -> vector<2x128xf32>
    %c96_i32_89 = arith.constant 96 : i32
    %282 = tpu.dynamic_rotate %279 by %c96_i32_89 dim 1 : vector<2x128xf32>, i32 -> vector<2x128xf32>
    %283 = arith.mulf %282, %245 : vector<2x128xf32>
    %284 = arith.mulf %279, %280 : vector<2x128xf32>
    %285 = arith.addf %283, %284 : vector<2x128xf32>
    %286 = math.tanh %285 : vector<2x128xf32>
    %287 = arith.mulf %281, %286 : vector<2x128xf32>
    %c7 = arith.constant 7 : index
    %c0_90 = arith.constant 0 : index
    %c0_91 = arith.constant 0 : index
    %288 = vector.load %arg1[%c7, %c0_90, %c0_91] : memref<8x2x32xf32, #tpu.memory_space<vmem>>, vector<1x2x32xf32>
    %289 = vector.shape_cast %288 : vector<1x2x32xf32> to vector<2x32xf32>
    %290 = tpu.concatenate %289, %268 in 1 : vector<2x32xf32>, vector<2x128xf32> -> vector<2x160xf32>
    %cst_92 = arith.constant dense<0.000000e+00> : vector<2x128xf32>
    %291 = tpu.matmul %290, %0, %cst_92 {dimension_numbers = #tpu.dot_dimension_numbers<[1], [0], [0], [1], [0, 0, 1, 1], [], []>} : vector<2x160xf32>, vector<160x128xf32>, vector<2x128xf32> -> vector<2x128xf32>
    %292 = vector.broadcast %1 : vector<1x128xf32> to vector<2x128xf32>
    %293 = arith.addf %291, %292 : vector<2x128xf32>
    %294 = arith.negf %293 : vector<2x128xf32>
    %295 = math.exp %294 : vector<2x128xf32>
    %cst_93 = arith.constant 1.000000e+00 : f32
    %296 = vector.broadcast %cst_93 : f32 to vector<2x128xf32>
    %297 = arith.addf %296, %295 : vector<2x128xf32>
    %298 = arith.divf %296, %297 : vector<2x128xf32>
    %299 = math.tanh %293 : vector<2x128xf32>
    %300 = arith.select %6, %298, %299 : vector<2x128xi1>, vector<2x128xf32>
    %c32_i32_94 = arith.constant 32 : i32
    %301 = tpu.dynamic_rotate %300 by %c32_i32_94 dim 1 : vector<2x128xf32>, i32 -> vector<2x128xf32>
    %c64_i32_95 = arith.constant 64 : i32
    %302 = tpu.dynamic_rotate %300 by %c64_i32_95 dim 1 : vector<2x128xf32>, i32 -> vector<2x128xf32>
    %c96_i32_96 = arith.constant 96 : i32
    %303 = tpu.dynamic_rotate %300 by %c96_i32_96 dim 1 : vector<2x128xf32>, i32 -> vector<2x128xf32>
    %304 = arith.mulf %303, %266 : vector<2x128xf32>
    %305 = arith.mulf %300, %301 : vector<2x128xf32>
    %306 = arith.addf %304, %305 : vector<2x128xf32>
    %307 = math.tanh %306 : vector<2x128xf32>
    %308 = arith.mulf %302, %307 : vector<2x128xf32>
    %309 = tpu.concatenate %308, %287 in 1 : vector<2x128xf32>, vector<2x128xf32> -> vector<2x256xf32>
    %cst_97 = arith.constant dense<0.000000e+00> : vector<2x128xf32>
    %310 = tpu.matmul %309, %2, %cst_97 {dimension_numbers = #tpu.dot_dimension_numbers<[1], [0], [0], [1], [0, 0, 1, 1], [], []>} : vector<2x256xf32>, vector<256x128xf32>, vector<2x128xf32> -> vector<2x128xf32>
    %311 = vector.broadcast %3 : vector<1x128xf32> to vector<2x128xf32>
    %312 = arith.addf %310, %311 : vector<2x128xf32>
    %313 = arith.negf %312 : vector<2x128xf32>
    %314 = math.exp %313 : vector<2x128xf32>
    %cst_98 = arith.constant 1.000000e+00 : f32
    %315 = vector.broadcast %cst_98 : f32 to vector<2x128xf32>
    %316 = arith.addf %315, %314 : vector<2x128xf32>
    %317 = arith.divf %315, %316 : vector<2x128xf32>
    %318 = math.tanh %312 : vector<2x128xf32>
    %319 = arith.select %6, %317, %318 : vector<2x128xi1>, vector<2x128xf32>
    %c32_i32_99 = arith.constant 32 : i32
    %320 = tpu.dynamic_rotate %319 by %c32_i32_99 dim 1 : vector<2x128xf32>, i32 -> vector<2x128xf32>
    %c64_i32_100 = arith.constant 64 : i32
    %321 = tpu.dynamic_rotate %319 by %c64_i32_100 dim 1 : vector<2x128xf32>, i32 -> vector<2x128xf32>
    %c96_i32_101 = arith.constant 96 : i32
    %322 = tpu.dynamic_rotate %319 by %c96_i32_101 dim 1 : vector<2x128xf32>, i32 -> vector<2x128xf32>
    %323 = arith.mulf %322, %285 : vector<2x128xf32>
    %324 = arith.mulf %319, %320 : vector<2x128xf32>
    %325 = arith.addf %323, %324 : vector<2x128xf32>
    %326 = math.tanh %325 : vector<2x128xf32>
    %327 = arith.mulf %321, %326 : vector<2x128xf32>
    %328 = vector.extract_strided_slice %308 {offsets = [0, 0], sizes = [2, 32], strides = [1, 1]} : vector<2x128xf32> to vector<2x32xf32>
    %c0_102 = arith.constant 0 : index
    %c0_103 = arith.constant 0 : index
    %c0_104 = arith.constant 0 : index
    %329 = vector.load %arg6[%c0_102, %c0_103, %c0_104] : memref<2x2x32xf32, #tpu.memory_space<vmem>>, vector<1x2x32xf32>
    %330 = vector.shape_cast %329 : vector<1x2x32xf32> to vector<2x32xf32>
    %331 = vector.shape_cast %328 : vector<2x32xf32> to vector<1x2x32xf32>
    tpu.vector_store %arg6[%c0_102, %c0_103, %c0_104], %331 {strides = array<i32>} : memref<2x2x32xf32, #tpu.memory_space<vmem>>, vector<1x2x32xf32>,
    %332 = vector.extract_strided_slice %327 {offsets = [0, 0], sizes = [2, 32], strides = [1, 1]} : vector<2x128xf32> to vector<2x32xf32>
    %c1_105 = arith.constant 1 : index
    %c0_106 = arith.constant 0 : index
    %c0_107 = arith.constant 0 : index
    %333 = vector.load %arg6[%c1_105, %c0_106, %c0_107] : memref<2x2x32xf32, #tpu.memory_space<vmem>>, vector<1x2x32xf32>
    %334 = vector.shape_cast %333 : vector<1x2x32xf32> to vector<2x32xf32>
    %335 = vector.shape_cast %332 : vector<2x32xf32> to vector<1x2x32xf32>
    tpu.vector_store %arg6[%c1_105, %c0_106, %c0_107], %335 {strides = array<i32>} : memref<2x2x32xf32, #tpu.memory_space<vmem>>, vector<1x2x32xf32>,
    %336 = vector.extract_strided_slice %306 {offsets = [0, 0], sizes = [2, 32], strides = [1, 1]} : vector<2x128xf32> to vector<2x32xf32>
    %c0_108 = arith.constant 0 : index
    %c0_109 = arith.constant 0 : index
    %c0_110 = arith.constant 0 : index
    %337 = vector.load %arg7[%c0_108, %c0_109, %c0_110] : memref<2x2x32xf32, #tpu.memory_space<vmem>>, vector<1x2x32xf32>
    %338 = vector.shape_cast %337 : vector<1x2x32xf32> to vector<2x32xf32>
    %339 = vector.shape_cast %336 : vector<2x32xf32> to vector<1x2x32xf32>
    tpu.vector_store %arg7[%c0_108, %c0_109, %c0_110], %339 {strides = array<i32>} : memref<2x2x32xf32, #tpu.memory_space<vmem>>, vector<1x2x32xf32>,
    %340 = vector.extract_strided_slice %325 {offsets = [0, 0], sizes = [2, 32], strides = [1, 1]} : vector<2x128xf32> to vector<2x32xf32>
    %c1_111 = arith.constant 1 : index
    %c0_112 = arith.constant 0 : index
    %c0_113 = arith.constant 0 : index
    %341 = vector.load %arg7[%c1_111, %c0_112, %c0_113] : memref<2x2x32xf32, #tpu.memory_space<vmem>>, vector<1x2x32xf32>
    %342 = vector.shape_cast %341 : vector<1x2x32xf32> to vector<2x32xf32>
    %343 = vector.shape_cast %340 : vector<2x32xf32> to vector<1x2x32xf32>
    tpu.vector_store %arg7[%c1_111, %c0_112, %c0_113], %343 {strides = array<i32>} : memref<2x2x32xf32, #tpu.memory_space<vmem>>, vector<1x2x32xf32>,
    return
  }
  func.func @transform_0(%arg0: i32) -> (i32, i32, i32) {
    %c0_i32 = arith.constant 0 : i32
    %c0_i32_0 = arith.constant 0 : i32
    %c0_i32_1 = arith.constant 0 : i32
    %c0_i32_2 = arith.constant 0 : i32
    return %c0_i32, %c0_i32_0, %c0_i32_1 : i32, i32, i32
  }
  func.func @transform_1(%arg0: i32) -> (i32, i32) {
    %c0_i32 = arith.constant 0 : i32
    %c0_i32_0 = arith.constant 0 : i32
    %c0_i32_1 = arith.constant 0 : i32
    return %c0_i32, %c0_i32_0 : i32, i32
  }
  func.func @transform_2(%arg0: i32) -> (i32, i32) {
    %c0_i32 = arith.constant 0 : i32
    %c0_i32_0 = arith.constant 0 : i32
    %c0_i32_1 = arith.constant 0 : i32
    return %c0_i32, %c0_i32_0 : i32, i32
  }
  func.func @transform_3(%arg0: i32) -> (i32, i32) {
    %c0_i32 = arith.constant 0 : i32
    %c0_i32_0 = arith.constant 0 : i32
    %c0_i32_1 = arith.constant 0 : i32
    return %c0_i32, %c0_i32_0 : i32, i32
  }
  func.func @transform_4(%arg0: i32) -> (i32, i32) {
    %c0_i32 = arith.constant 0 : i32
    %c0_i32_0 = arith.constant 0 : i32
    %c0_i32_1 = arith.constant 0 : i32
    return %c0_i32, %c0_i32_0 : i32, i32
  }
  func.func @transform_5(%arg0: i32) -> (i32, i32, i32) {
    %c0_i32 = arith.constant 0 : i32
    %c0_i32_0 = arith.constant 0 : i32
    %c0_i32_1 = arith.constant 0 : i32
    %c0_i32_2 = arith.constant 0 : i32
    return %c0_i32, %c0_i32_0, %c0_i32_1 : i32, i32, i32
  }
  func.func @transform_6(%arg0: i32) -> (i32, i32, i32) {
    %c0_i32 = arith.constant 0 : i32
    %c0_i32_0 = arith.constant 0 : i32
    %c0_i32_1 = arith.constant 0 : i32
    %c0_i32_2 = arith.constant 0 : i32
    return %c0_i32, %c0_i32_0, %c0_i32_1 : i32, i32, i32
  }
}

</mosaic_0001>

<llo_original>
// kernel: encoder_forward.1
$region0: #{encoder_forward.1}
  #allocation0 [shape = 'u32[]', space=smem, size = 0x4, offset = 0x4, fixed_abs, tag = 'smem constant byte address 0x4 - core index']
  #allocation1 [shape = 'u32[72,128]{1,0:T(1,128)}', space=vmem, size = 0x9000, scoped, tag = 'internal scratch']
  %s0 = inlined_call_operand.vmem [shape: f32[8,2,32], index: 0, kind: input, shape index: {}]
  %s1 = inlined_call_operand.hbm [shape: f32[160,128], index: 1, kind: input, shape index: {}]
  %s2 = inlined_call_operand.vmem [shape: f32[1,128], index: 2, kind: input, shape index: {}]
  %s3 = inlined_call_operand.hbm [shape: f32[256,128], index: 3, kind: input, shape index: {}]
  %s4 = inlined_call_operand.vmem [shape: f32[1,128], index: 4, kind: input, shape index: {}]
  %s5 = inlined_call_operand.hbm [shape: f32[2,2,32], index: 5, kind: output, shape index: {0}]
  %s6 = inlined_call_operand.hbm [shape: f32[2,2,32], index: 6, kind: output, shape index: {1}]
  %7 = xla_tuple %s5, %s6
  %s8 = sld [smem:[#allocation0]]
  $region46: #{encoder_forward.1} parent=0
    _
  %s10 = ssub.s32 1, %s8
  %s11 = scalar_select 0, %s10, %s8
  $region1: #{encoder_forward.1} parent=0
    #allocation2 [shape = 'u8[81920]{0}', space=vmem, size = 0x14000, scoped, tag = 'input window, operand 1, single buffered']
    #allocation3 [shape = 's32[1]{0}', space=sflag, size = 0x4, scoped, tag = 'scoped memory for encoder_forward.1']
    #allocation4 [shape = 's32[1]{0}', space=sflag, size = 0x4, scoped, tag = 'scoped memory for encoder_forward.1']
    #allocation5 [shape = 'u8[131072]{0}', space=vmem, size = 0x20000, scoped, tag = 'input window, operand 3, single buffered']
    #allocation6 [shape = 's32[1]{0}', space=sflag, size = 0x4, scoped, tag = 'scoped memory for encoder_forward.1']
    #allocation7 [shape = 'u8[2048]{0}', space=vmem, size = 0x800, scoped, tag = 'output window, operand 0, single buffered']
    #allocation8 [shape = 'u8[2048]{0}', space=vmem, size = 0x800, scoped, tag = 'output window, operand 1, single buffered']
    #allocation9 [shape = 's32[1]{0}', space=sflag, size = 0x4, scoped, tag = 'scoped memory for encoder_forward.1']
    %12 = vsyncpa [#allocation3], 0
    %13 = vsyncpa [#allocation6], 0
    %14 = vsyncpa [#allocation4], 0
    %15 = vsyncpa [#allocation9], 0
    // Predicated region
    $region2: #{encoder_forward.1} parent=1 // pred_check
      _
    $region3: #{encoder_forward.1} parent=1 // pred_check_branch
      %17 = sbr.rel (0) target = $region5
    $region4: #{encoder_forward.1} parent=1 // pred_region
      _
    $region5: #{encoder_forward.1} parent=1 // pred_fallthru
      _
    // Predicated region
    $region6: #{encoder_forward.1} parent=1 // pred_check
      _
    $region7: #{encoder_forward.1} parent=1 // pred_check_branch
      %19 = sbr.rel (0) target = $region9
    $region8: #{encoder_forward.1} parent=1 // pred_region
      %21 = vsyncadd [#allocation3], 0
      %s22 = sshll.u32 %s1, 4
      %s23 = int_to_ptr.hbm [resolvable:$true] %s22
      %s24 = sshll.u32 [#allocation2], 4
      %s25 = int_to_ptr.vmem [resolvable:$true] %s24
      %30 = dma.hbm_to_vmem [thread:$0]  %s23, 2560, %s25, [#allocation3], 128, 128, 8
    $region9: #{encoder_forward.1} parent=1 // pred_fallthru
      _
    // Predicated region
    $region10: #{encoder_forward.1} parent=1 // pred_check
      _
    $region11: #{encoder_forward.1} parent=1 // pred_check_branch
      %32 = sbr.rel (0) target = $region13
    $region12: #{encoder_forward.1} parent=1 // pred_region
      _
    $region13: #{encoder_forward.1} parent=1 // pred_fallthru
      _
    // Predicated region
    $region14: #{encoder_forward.1} parent=1 // pred_check
      _
    $region15: #{encoder_forward.1} parent=1 // pred_check_branch
      %34 = sbr.rel (0) target = $region17
    $region16: #{encoder_forward.1} parent=1 // pred_region
      %36 = vsyncadd [#allocation6], 0
      %s37 = sshll.u32 %s3, 4
      %s38 = int_to_ptr.hbm [resolvable:$true] %s37
      %s39 = sshll.u32 [#allocation5], 4
      %s40 = int_to_ptr.vmem [resolvable:$true] %s39
      %45 = dma.hbm_to_vmem [thread:$0]  %s38, 4096, %s40, [#allocation6], 128, 128, 8
    $region17: #{encoder_forward.1} parent=1 // pred_fallthru
      _
    // Predicated region
    $region18: #{encoder_forward.1} parent=1 // pred_check
      _
    $region19: #{encoder_forward.1} parent=1 // pred_check_branch
      %47 = sbr.rel (0) target = $region21
    $region20: #{encoder_forward.1} parent=1 // pred_region
      _
    $region21: #{encoder_forward.1} parent=1 // pred_fallthru
      _
    // Predicated region
    $region22: #{encoder_forward.1} parent=1 // pred_check
      _
    $region23: #{encoder_forward.1} parent=1 // pred_check_branch
      %49 = sbr.rel (0) target = $region25
    $region24: #{encoder_forward.1} parent=1 // pred_region
      %51 = dma.done [#allocation3], 2560
    $region25: #{encoder_forward.1} parent=1 // pred_fallthru
      _
    // Predicated region
    $region26: #{encoder_forward.1} parent=1 // pred_check
      _
    $region27: #{encoder_forward.1} parent=1 // pred_check_branch
      %53 = sbr.rel (0) target = $region29
    $region28: #{encoder_forward.1} parent=1 // pred_region
      %55 = dma.done [#allocation6], 4096
    $region29: #{encoder_forward.1} parent=1 // pred_fallthru
      _
    %v56 = vld [vmem:[#allocation2] sm:$0xff]
    %v57 = vld [vmem:[#allocation2 + $0x8] sm:$0xff]
    %v58 = vld [vmem:[#allocation2 + $0x10] sm:$0xff]
    %v59 = vld [vmem:[#allocation2 + $0x18] sm:$0xff]
    %v60 = vld [vmem:[#allocation2 + $0x20] sm:$0xff]
    %v61 = vld [vmem:[#allocation2 + $0x28] sm:$0xff]
    %v62 = vld [vmem:[#allocation2 + $0x30] sm:$0xff]
    %v63 = vld [vmem:[#allocation2 + $0x38] sm:$0xff]
    %v64 = vld [vmem:[#allocation2 + $0x40] sm:$0xff]
    %v65 = vld [vmem:[#allocation2 + $0x48] sm:$0xff]
    %v66 = vld [vmem:[#allocation2 + $0x50] sm:$0xff]
    %v67 = vld [vmem:[#allocation2 + $0x58] sm:$0xff]
    %v68 = vld [vmem:[#allocation2 + $0x60] sm:$0xff]
    %v69 = vld [vmem:[#allocation2 + $0x68] sm:$0xff]
    %v70 = vld [vmem:[#allocation2 + $0x70] sm:$0xff]
    %v71 = vld [vmem:[#allocation2 + $0x78] sm:$0xff]
    %v72 = vld [vmem:[#allocation2 + $0x80] sm:$0xff]
    %v73 = vld [vmem:[#allocation2 + $0x88] sm:$0xff]
    %v74 = vld [vmem:[#allocation2 + $0x90] sm:$0xff]
    %v75 = vld [vmem:[#allocation2 + $0x98] sm:$0xff]
    %v76 = vld [vmem:[%s2] sm:$0x1]
    %v77 = vld [vmem:[#allocation5] sm:$0xff]
    %v78 = vld [vmem:[#allocation5 + $0x8] sm:$0xff]
    %v79 = vld [vmem:[#allocation5 + $0x10] sm:$0xff]
    %v80 = vld [vmem:[#allocation5 + $0x18] sm:$0xff]
    %v81 = vld [vmem:[#allocation5 + $0x20] sm:$0xff]
    %v82 = vld [vmem:[#allocation5 + $0x28] sm:$0xff]
    %v83 = vld [vmem:[#allocation5 + $0x30] sm:$0xff]
    %v84 = vld [vmem:[#allocation5 + $0x38] sm:$0xff]
    %v85 = vld [vmem:[#allocation5 + $0x40] sm:$0xff]
    %v86 = vld [vmem:[#allocation5 + $0x48] sm:$0xff]
    %v87 = vld [vmem:[#allocation5 + $0x50] sm:$0xff]
    %v88 = vld [vmem:[#allocation5 + $0x58] sm:$0xff]
    %v89 = vld [vmem:[#allocation5 + $0x60] sm:$0xff]
    %v90 = vld [vmem:[#allocation5 + $0x68] sm:$0xff]
    %v91 = vld [vmem:[#allocation5 + $0x70] sm:$0xff]
    %v92 = vld [vmem:[#allocation5 + $0x78] sm:$0xff]
    %v93 = vld [vmem:[#allocation5 + $0x80] sm:$0xff]
    %v94 = vld [vmem:[#allocation5 + $0x88] sm:$0xff]
    %v95 = vld [vmem:[#allocation5 + $0x90] sm:$0xff]
    %v96 = vld [vmem:[#allocation5 + $0x98] sm:$0xff]
    %v97 = vld [vmem:[#allocation5 + $0xa0] sm:$0xff]
    %v98 = vld [vmem:[#allocation5 + $0xa8] sm:$0xff]
    %v99 = vld [vmem:[#allocation5 + $0xb0] sm:$0xff]
    %v100 = vld [vmem:[#allocation5 + $0xb8] sm:$0xff]
    %v101 = vld [vmem:[#allocation5 + $0xc0] sm:$0xff]
    %v102 = vld [vmem:[#allocation5 + $0xc8] sm:$0xff]
    %v103 = vld [vmem:[#allocation5 + $0xd0] sm:$0xff]
    %v104 = vld [vmem:[#allocation5 + $0xd8] sm:$0xff]
    %v105 = vld [vmem:[#allocation5 + $0xe0] sm:$0xff]
    %v106 = vld [vmem:[#allocation5 + $0xe8] sm:$0xff]
    %v107 = vld [vmem:[#allocation5 + $0xf0] sm:$0xff]
    %v108 = vld [vmem:[#allocation5 + $0xf8] sm:$0xff]
    %v109 = vld [vmem:[%s4] sm:$0x1]
    %v110 = vlaneseq
    %v111 = vand.u32 %v110, 127
    %vm112 = vcmp.lt.s32.totalorder %v111, 96
    %v113 = vld [vmem:[%s0] sm:$0x3]
    %vm114 = vcmask 261120
    %v115 = vsel %vm114, %v113, 0.0
    %v117 = vperm.slane %v76, 0
    %v120 = vsel %vm114, 0.0, 0
    %122 = vmatpush.msra.mxu0 %v71
    %123 = vmatpush.msra.mxu0 %v70
    %124 = vmatpush.msra.mxu0 %v69
    %125 = vmatpush.msra.mxu0 %v68
    %126 = vmatpush.msra.mxu0 %v67
    %127 = vmatpush.msra.mxu0 %v66
    %128 = vmatpush.msra.mxu0 %v65
    %129 = vmatpush.msra.mxu0 %v64
    %130 = vmatpush.msra.mxu0 %v63
    %131 = vmatpush.msra.mxu0 %v62
    %132 = vmatpush.msra.mxu0 %v61
    %133 = vmatpush.msra.mxu0 %v60
    %134 = vmatpush.msra.mxu0 %v59
    %135 = vmatpush.msra.mxu0 %v58
    %136 = vmatpush.msra.mxu0 %v57
    %137 = vmatpush.msra.mxu0 %v56
    %138 = vmatmul.f32.gmra.mxu0 %v115
    %v139 = vpop.f32.mrf.mxu0
    %v140 = vadd.f32 %v117, %v139
    %141 = vdwg.mxu0
    %142 = vmatpush.msra.mxu0 0.0
    %143 = vmatpush.msra.mxu0 0.0
    %144 = vmatpush.msra.mxu0 0.0
    %145 = vmatpush.msra.mxu0 0.0
    %146 = vmatpush.msra.mxu0 0.0
    %147 = vmatpush.msra.mxu0 0.0
    %148 = vmatpush.msra.mxu0 0.0
    %149 = vmatpush.msra.mxu0 0.0
    %150 = vmatpush.msra.mxu0 0.0
    %151 = vmatpush.msra.mxu0 0.0
    %152 = vmatpush.msra.mxu0 0.0
    %153 = vmatpush.msra.mxu0 0.0
    %154 = vmatpush.msra.mxu0 %v75
    %155 = vmatpush.msra.mxu0 %v74
    %156 = vmatpush.msra.mxu0 %v73
    %157 = vmatpush.msra.mxu0 %v72
    %158 = vmatmul.f32.gmra.mxu0 %v120
    %v159 = vpop.f32.mrf.mxu0
    %v160 = vadd.f32 %v140, %v159
    %161 = vdwg.mxu0
    %v162 = vxor.u32 %v160, 2147483648
    %v163 = vmul.f32 %v162, 1.442695
    %v164 = vpow.pop %v163
    %v165 = vadd.f32 %v164, 1.0
    %v166 = vrcp.pop %v165
    %v167 = vmul.f32 %v165, %v166
    %v168 = vsub.f32 1.0, %v167
    %v169 = vmul.f32 %v166, %v168
    %v170 = vadd.f32 %v166, %v169
    %vm171 = vweird.f32 %v165
    %vm172 = vweird.f32 %v166
    %vm173 = vmor %vm171, %vm172
    %v174 = vsel %vm173, %v166, %v170
    %v175 = vand.u32 2147483647, %v165
    %vm176 = vcmp.eq.f32.partialorder %v175, 8.507059e+37
    %v177 = vand.u32 %v165, 2147483648
    %v178 = vor.u32 1.1754944e-38, %v177
    %v179 = vsel %vm176, %v178, %v174
    %v180 = vmul.f32 1.0, %v179
    %v181 = vtanh.pop %v160
    %v182 = vsel %vm112, %v180, %v181
    %183 = vrot.lane.b32.xlu0 %v182, 32
    %v184 = vpop.permute.xlu0 %183
    %185 = vrot.lane.b32.xlu0 %v182, 64
    %v186 = vpop.permute.xlu0 %185
    %187 = vrot.lane.b32.xlu0 %v182, 96
    %v188 = vpop.permute.xlu0 %187
    %v189 = vmul.f32 %v188, 0.0
    %v190 = vmul.f32 %v182, %v184
    %v191 = vadd.f32 %v189, %v190
    %v192 = vtanh.pop %v191
    %v193 = vmul.f32 %v186, %v192
    %v195 = vperm.slane %v109, 0
    %197 = vmatpush.msra.mxu0 %v92
    %198 = vmatpush.msra.mxu0 %v91
    %199 = vmatpush.msra.mxu0 %v90
    %200 = vmatpush.msra.mxu0 %v89
    %201 = vmatpush.msra.mxu0 %v88
    %202 = vmatpush.msra.mxu0 %v87
    %203 = vmatpush.msra.mxu0 %v86
    %204 = vmatpush.msra.mxu0 %v85
    %205 = vmatpush.msra.mxu0 %v84
    %206 = vmatpush.msra.mxu0 %v83
    %207 = vmatpush.msra.mxu0 %v82
    %208 = vmatpush.msra.mxu0 %v81
    %209 = vmatpush.msra.mxu0 %v80
    %210 = vmatpush.msra.mxu0 %v79
    %211 = vmatpush.msra.mxu0 %v78
    %212 = vmatpush.msra.mxu0 %v77
    %213 = vmatmul.f32.gmra.mxu0 %v193
    %v214 = vpop.f32.mrf.mxu0
    %v215 = vadd.f32 %v195, %v214
    %216 = vdwg.mxu0
    %217 = vmatpush.msra.mxu0 %v108
    %218 = vmatpush.msra.mxu0 %v107
    %219 = vmatpush.msra.mxu0 %v106
    %220 = vmatpush.msra.mxu0 %v105
    %221 = vmatpush.msra.mxu0 %v104
    %222 = vmatpush.msra.mxu0 %v103
    %223 = vmatpush.msra.mxu0 %v102
    %224 = vmatpush.msra.mxu0 %v101
    %225 = vmatpush.msra.mxu0 %v100
    %226 = vmatpush.msra.mxu0 %v99
    %227 = vmatpush.msra.mxu0 %v98
    %228 = vmatpush.msra.mxu0 %v97
    %229 = vmatpush.msra.mxu0 %v96
    %230 = vmatpush.msra.mxu0 %v95
    %231 = vmatpush.msra.mxu0 %v94
    %232 = vmatpush.msra.mxu0 %v93
    %233 = vmatmul.f32.gmra.mxu0 0.0
    %v234 = vpop.f32.mrf.mxu0
    %v235 = vadd.f32 %v215, %v234
    %236 = vdwg.mxu0
    %v237 = vxor.u32 %v235, 2147483648
    %v238 = vmul.f32 %v237, 1.442695
    %v239 = vpow.pop %v238
    %v240 = vadd.f32 %v239, 1.0
    %v241 = vrcp.pop %v240
    %v242 = vmul.f32 %v240, %v241
    %v243 = vsub.f32 1.0, %v242
    %v244 = vmul.f32 %v241, %v243
    %v245 = vadd.f32 %v241, %v244
    %vm246 = vweird.f32 %v240
    %vm247 = vweird.f32 %v241
    %vm248 = vmor %vm246, %vm247
    %v249 = vsel %vm248, %v241, %v245
    %v250 = vand.u32 2147483647, %v240
    %vm251 = vcmp.eq.f32.partialorder %v250, 8.507059e+37
    %v252 = vand.u32 %v240, 2147483648
    %v253 = vor.u32 1.1754944e-38, %v252
    %v254 = vsel %vm251, %v253, %v249
    %v255 = vmul.f32 1.0, %v254
    %v256 = vtanh.pop %v235
    %v257 = vsel %vm112, %v255, %v256
    %258 = vrot.lane.b32.xlu0 %v257, 32
    %v259 = vpop.permute.xlu0 %258
    %260 = vrot.lane.b32.xlu0 %v257, 64
    %v261 = vpop.permute.xlu0 %260
    %262 = vrot.lane.b32.xlu0 %v257, 96
    %v263 = vpop.permute.xlu0 %262
    %v264 = vmul.f32 %v263, 0.0
    %v265 = vmul.f32 %v257, %v259
    %v266 = vadd.f32 %v264, %v265
    %v267 = vtanh.pop %v266
    %v268 = vmul.f32 %v261, %v267
    %s269 = scalar_lea.vmem %s0, 2
    %v270 = vld [vmem:[%s269] sm:$0x3]
    %272 = vrot.lane.b32.xlu0 %v193, 32
    %v273 = vpop.permute.xlu0 %272
    %v275 = vsel %vm114, %v270, %v273
    %v276 = vsel %vm114, %v273, 0
    %278 = vmatpush.msra.mxu0 %v71
    %279 = vmatpush.msra.mxu0 %v70
    %280 = vmatpush.msra.mxu0 %v69
    %281 = vmatpush.msra.mxu0 %v68
    %282 = vmatpush.msra.mxu0 %v67
    %283 = vmatpush.msra.mxu0 %v66
    %284 = vmatpush.msra.mxu0 %v65
    %285 = vmatpush.msra.mxu0 %v64
    %286 = vmatpush.msra.mxu0 %v63
    %287 = vmatpush.msra.mxu0 %v62
    %288 = vmatpush.msra.mxu0 %v61
    %289 = vmatpush.msra.mxu0 %v60
    %290 = vmatpush.msra.mxu0 %v59
    %291 = vmatpush.msra.mxu0 %v58
    %292 = vmatpush.msra.mxu0 %v57
    %293 = vmatpush.msra.mxu0 %v56
    %294 = vmatmul.f32.gmra.mxu0 %v275
    %v295 = vpop.f32.mrf.mxu0
    %v296 = vadd.f32 %v117, %v295
    %297 = vdwg.mxu0
    %298 = vmatpush.msra.mxu0 0.0
    %299 = vmatpush.msra.mxu0 0.0
    %300 = vmatpush.msra.mxu0 0.0
    %301 = vmatpush.msra.mxu0 0.0
    %302 = vmatpush.msra.mxu0 0.0
    %303 = vmatpush.msra.mxu0 0.0
    %304 = vmatpush.msra.mxu0 0.0
    %305 = vmatpush.msra.mxu0 0.0
    %306 = vmatpush.msra.mxu0 0.0
    %307 = vmatpush.msra.mxu0 0.0
    %308 = vmatpush.msra.mxu0 0.0
    %309 = vmatpush.msra.mxu0 0.0
    %310 = vmatpush.msra.mxu0 %v75
    %311 = vmatpush.msra.mxu0 %v74
    %312 = vmatpush.msra.mxu0 %v73
    %313 = vmatpush.msra.mxu0 %v72
    %314 = vmatmul.f32.gmra.mxu0 %v276
    %v315 = vpop.f32.mrf.mxu0
    %v316 = vadd.f32 %v296, %v315
    %317 = vdwg.mxu0
    %v318 = vxor.u32 %v316, 2147483648
    %v319 = vmul.f32 %v318, 1.442695
    %v320 = vpow.pop %v319
    %v321 = vadd.f32 %v320, 1.0
    %v322 = vrcp.pop %v321
    %v323 = vmul.f32 %v321, %v322
    %v324 = vsub.f32 1.0, %v323
    %v325 = vmul.f32 %v322, %v324
    %v326 = vadd.f32 %v322, %v325
    %vm327 = vweird.f32 %v321
    %vm328 = vweird.f32 %v322
    %vm329 = vmor %vm327, %vm328
    %v330 = vsel %vm329, %v322, %v326
    %v331 = vand.u32 2147483647, %v321
    %vm332 = vcmp.eq.f32.partialorder %v331, 8.507059e+37
    %v333 = vand.u32 %v321, 2147483648
    %v334 = vor.u32 1.1754944e-38, %v333
    %v335 = vsel %vm332, %v334, %v330
    %v336 = vmul.f32 1.0, %v335
    %v337 = vtanh.pop %v316
    %v338 = vsel %vm112, %v336, %v337
    %339 = vrot.lane.b32.xlu0 %v338, 32
    %v340 = vpop.permute.xlu0 %339
    %341 = vrot.lane.b32.xlu0 %v338, 64
    %v342 = vpop.permute.xlu0 %341
    %343 = vrot.lane.b32.xlu0 %v338, 96
    %v344 = vpop.permute.xlu0 %343
    %v345 = vmul.f32 %v344, %v191
    %v346 = vmul.f32 %v338, %v340
    %v347 = vadd.f32 %v345, %v346
    %v348 = vtanh.pop %v347
    %v349 = vmul.f32 %v342, %v348
    %350 = vmatpush.msra.mxu0 %v92
    %351 = vmatpush.msra.mxu0 %v91
    %352 = vmatpush.msra.mxu0 %v90
    %353 = vmatpush.msra.mxu0 %v89
    %354 = vmatpush.msra.mxu0 %v88
    %355 = vmatpush.msra.mxu0 %v87
    %356 = vmatpush.msra.mxu0 %v86
    %357 = vmatpush.msra.mxu0 %v85
    %358 = vmatpush.msra.mxu0 %v84
    %359 = vmatpush.msra.mxu0 %v83
    %360 = vmatpush.msra.mxu0 %v82
    %361 = vmatpush.msra.mxu0 %v81
    %362 = vmatpush.msra.mxu0 %v80
    %363 = vmatpush.msra.mxu0 %v79
    %364 = vmatpush.msra.mxu0 %v78
    %365 = vmatpush.msra.mxu0 %v77
    %366 = vmatmul.f32.gmra.mxu0 %v349
    %v367 = vpop.f32.mrf.mxu0
    %v368 = vadd.f32 %v195, %v367
    %369 = vdwg.mxu0
    %370 = vmatpush.msra.mxu0 %v108
    %371 = vmatpush.msra.mxu0 %v107
    %372 = vmatpush.msra.mxu0 %v106
    %373 = vmatpush.msra.mxu0 %v105
    %374 = vmatpush.msra.mxu0 %v104
    %375 = vmatpush.msra.mxu0 %v103
    %376 = vmatpush.msra.mxu0 %v102
    %377 = vmatpush.msra.mxu0 %v101
    %378 = vmatpush.msra.mxu0 %v100
    %379 = vmatpush.msra.mxu0 %v99
    %380 = vmatpush.msra.mxu0 %v98
    %381 = vmatpush.msra.mxu0 %v97
    %382 = vmatpush.msra.mxu0 %v96
    %383 = vmatpush.msra.mxu0 %v95
    %384 = vmatpush.msra.mxu0 %v94
    %385 = vmatpush.msra.mxu0 %v93
    %386 = vmatmul.f32.gmra.mxu0 %v268
    %v387 = vpop.f32.mrf.mxu0
    %v388 = vadd.f32 %v368, %v387
    %389 = vdwg.mxu0
    %v390 = vxor.u32 %v388, 2147483648
    %v391 = vmul.f32 %v390, 1.442695
    %v392 = vpow.pop %v391
    %v393 = vadd.f32 %v392, 1.0
    %v394 = vrcp.pop %v393
    %v395 = vmul.f32 %v393, %v394
    %v396 = vsub.f32 1.0, %v395
    %v397 = vmul.f32 %v394, %v396
    %v398 = vadd.f32 %v394, %v397
    %vm399 = vweird.f32 %v393
    %vm400 = vweird.f32 %v394
    %vm401 = vmor %vm399, %vm400
    %v402 = vsel %vm401, %v394, %v398
    %v403 = vand.u32 2147483647, %v393
    %vm404 = vcmp.eq.f32.partialorder %v403, 8.507059e+37
    %v405 = vand.u32 %v393, 2147483648
    %v406 = vor.u32 1.1754944e-38, %v405
    %v407 = vsel %vm404, %v406, %v402
    %v408 = vmul.f32 1.0, %v407
    %v409 = vtanh.pop %v388
    %v410 = vsel %vm112, %v408, %v409
    %411 = vrot.lane.b32.xlu0 %v410, 32
    %v412 = vpop.permute.xlu0 %411
    %413 = vrot.lane.b32.xlu0 %v410, 64
    %v414 = vpop.permute.xlu0 %413
    %415 = vrot.lane.b32.xlu0 %v410, 96
    %v416 = vpop.permute.xlu0 %415
    %v417 = vmul.f32 %v416, %v266
    %v418 = vmul.f32 %v410, %v412
    %v419 = vadd.f32 %v417, %v418
    %v420 = vtanh.pop %v419
    %v421 = vmul.f32 %v414, %v420
    %s422 = scalar_lea.vmem %s0, 4
    %v423 = vld [vmem:[%s422] sm:$0x3]
    %425 = vrot.lane.b32.xlu0 %v349, 32
    %v426 = vpop.permute.xlu0 %425
    %v428 = vsel %vm114, %v423, %v426
    %v429 = vsel %vm114, %v426, 0
    %431 = vmatpush.msra.mxu0 %v71
    %432 = vmatpush.msra.mxu0 %v70
    %433 = vmatpush.msra.mxu0 %v69
    %434 = vmatpush.msra.mxu0 %v68
    %435 = vmatpush.msra.mxu0 %v67
    %436 = vmatpush.msra.mxu0 %v66
    %437 = vmatpush.msra.mxu0 %v65
    %438 = vmatpush.msra.mxu0 %v64
    %439 = vmatpush.msra.mxu0 %v63
    %440 = vmatpush.msra.mxu0 %v62
    %441 = vmatpush.msra.mxu0 %v61
    %442 = vmatpush.msra.mxu0 %v60
    %443 = vmatpush.msra.mxu0 %v59
    %444 = vmatpush.msra.mxu0 %v58
    %445 = vmatpush.msra.mxu0 %v57
    %446 = vmatpush.msra.mxu0 %v56
    %447 = vmatmul.f32.gmra.mxu0 %v428
    %v448 = vpop.f32.mrf.mxu0
    %v449 = vadd.f32 %v117, %v448
    %450 = vdwg.mxu0
    %451 = vmatpush.msra.mxu0 0.0
    %452 = vmatpush.msra.mxu0 0.0
    %453 = vmatpush.msra.mxu0 0.0
    %454 = vmatpush.msra.mxu0 0.0
    %455 = vmatpush.msra.mxu0 0.0
    %456 = vmatpush.msra.mxu0 0.0
    %457 = vmatpush.msra.mxu0 0.0
    %458 = vmatpush.msra.mxu0 0.0
    %459 = vmatpush.msra.mxu0 0.0
    %460 = vmatpush.msra.mxu0 0.0
    %461 = vmatpush.msra.mxu0 0.0
    %462 = vmatpush.msra.mxu0 0.0
    %463 = vmatpush.msra.mxu0 %v75
    %464 = vmatpush.msra.mxu0 %v74
    %465 = vmatpush.msra.mxu0 %v73
    %466 = vmatpush.msra.mxu0 %v72
    %467 = vmatmul.f32.gmra.mxu0 %v429
    %v468 = vpop.f32.mrf.mxu0
    %v469 = vadd.f32 %v449, %v468
    %470 = vdwg.mxu0
    %v471 = vxor.u32 %v469, 2147483648
    %v472 = vmul.f32 %v471, 1.442695
    %v473 = vpow.pop %v472
    %v474 = vadd.f32 %v473, 1.0
    %v475 = vrcp.pop %v474
    %v476 = vmul.f32 %v474, %v475
    %v477 = vsub.f32 1.0, %v476
    %v478 = vmul.f32 %v475, %v477
    %v479 = vadd.f32 %v475, %v478
    %vm480 = vweird.f32 %v474
    %vm481 = vweird.f32 %v475
    %vm482 = vmor %vm480, %vm481
    %v483 = vsel %vm482, %v475, %v479
    %v484 = vand.u32 2147483647, %v474
    %vm485 = vcmp.eq.f32.partialorder %v484, 8.507059e+37
    %v486 = vand.u32 %v474, 2147483648
    %v487 = vor.u32 1.1754944e-38, %v486
    %v488 = vsel %vm485, %v487, %v483
    %v489 = vmul.f32 1.0, %v488
    %v490 = vtanh.pop %v469
    %v491 = vsel %vm112, %v489, %v490
    %492 = vrot.lane.b32.xlu0 %v491, 32
    %v493 = vpop.permute.xlu0 %492
    %494 = vrot.lane.b32.xlu0 %v491, 64
    %v495 = vpop.permute.xlu0 %494
    %496 = vrot.lane.b32.xlu0 %v491, 96
    %v497 = vpop.permute.xlu0 %496
    %v498 = vmul.f32 %v497, %v347
    %v499 = vmul.f32 %v491, %v493
    %v500 = vadd.f32 %v498, %v499
    %v501 = vtanh.pop %v500
    %v502 = vmul.f32 %v495, %v501
    %503 = vmatpush.msra.mxu0 %v92
    %504 = vmatpush.msra.mxu0 %v91
    %505 = vmatpush.msra.mxu0 %v90
    %506 = vmatpush.msra.mxu0 %v89
    %507 = vmatpush.msra.mxu0 %v88
    %508 = vmatpush.msra.mxu0 %v87
    %509 = vmatpush.msra.mxu0 %v86
    %510 = vmatpush.msra.mxu0 %v85
    %511 = vmatpush.msra.mxu0 %v84
    %512 = vmatpush.msra.mxu0 %v83
    %513 = vmatpush.msra.mxu0 %v82
    %514 = vmatpush.msra.mxu0 %v81
    %515 = vmatpush.msra.mxu0 %v80
    %516 = vmatpush.msra.mxu0 %v79
    %517 = vmatpush.msra.mxu0 %v78
    %518 = vmatpush.msra.mxu0 %v77
    %519 = vmatmul.f32.gmra.mxu0 %v502
    %v520 = vpop.f32.mrf.mxu0
    %v521 = vadd.f32 %v195, %v520
    %522 = vdwg.mxu0
    %523 = vmatpush.msra.mxu0 %v108
    %524 = vmatpush.msra.mxu0 %v107
    %525 = vmatpush.msra.mxu0 %v106
    %526 = vmatpush.msra.mxu0 %v105
    %527 = vmatpush.msra.mxu0 %v104
    %528 = vmatpush.msra.mxu0 %v103
    %529 = vmatpush.msra.mxu0 %v102
    %530 = vmatpush.msra.mxu0 %v101
    %531 = vmatpush.msra.mxu0 %v100
    %532 = vmatpush.msra.mxu0 %v99
    %533 = vmatpush.msra.mxu0 %v98
    %534 = vmatpush.msra.mxu0 %v97
    %535 = vmatpush.msra.mxu0 %v96
    %536 = vmatpush.msra.mxu0 %v95
    %537 = vmatpush.msra.mxu0 %v94
    %538 = vmatpush.msra.mxu0 %v93
    %539 = vmatmul.f32.gmra.mxu0 %v421
    %v540 = vpop.f32.mrf.mxu0
    %v541 = vadd.f32 %v521, %v540
    %542 = vdwg.mxu0
    %v543 = vxor.u32 %v541, 2147483648
    %v544 = vmul.f32 %v543, 1.442695
    %v545 = vpow.pop %v544
    %v546 = vadd.f32 %v545, 1.0
    %v547 = vrcp.pop %v546
    %v548 = vmul.f32 %v546, %v547
    %v549 = vsub.f32 1.0, %v548
    %v550 = vmul.f32 %v547, %v549
    %v551 = vadd.f32 %v547, %v550
    %vm552 = vweird.f32 %v546
    %vm553 = vweird.f32 %v547
    %vm554 = vmor %vm552, %vm553
    %v555 = vsel %vm554, %v547, %v551
    %v556 = vand.u32 2147483647, %v546
    %vm557 = vcmp.eq.f32.partialorder %v556, 8.507059e+37
    %v558 = vand.u32 %v546, 2147483648
    %v559 = vor.u32 1.1754944e-38, %v558
    %v560 = vsel %vm557, %v559, %v555
    %v561 = vmul.f32 1.0, %v560
    %v562 = vtanh.pop %v541
    %v563 = vsel %vm112, %v561, %v562
    %564 = vrot.lane.b32.xlu0 %v563, 32
    %v565 = vpop.permute.xlu0 %564
    %566 = vrot.lane.b32.xlu0 %v563, 64
    %v567 = vpop.permute.xlu0 %566
    %568 = vrot.lane.b32.xlu0 %v563, 96
    %v569 = vpop.permute.xlu0 %568
    %v570 = vmul.f32 %v569, %v419
    %v571 = vmul.f32 %v563, %v565
    %v572 = vadd.f32 %v570, %v571
    %v573 = vtanh.pop %v572
    %v574 = vmul.f32 %v567, %v573
    %s575 = scalar_lea.vmem %s0, 6
    %v576 = vld [vmem:[%s575] sm:$0x3]
    %578 = vrot.lane.b32.xlu0 %v502, 32
    %v579 = vpop.permute.xlu0 %578
    %v581 = vsel %vm114, %v576, %v579
    %v582 = vsel %vm114, %v579, 0
    %584 = vmatpush.msra.mxu0 %v71
    %585 = vmatpush.msra.mxu0 %v70
    %586 = vmatpush.msra.mxu0 %v69
    %587 = vmatpush.msra.mxu0 %v68
    %588 = vmatpush.msra.mxu0 %v67
    %589 = vmatpush.msra.mxu0 %v66
    %590 = vmatpush.msra.mxu0 %v65
    %591 = vmatpush.msra.mxu0 %v64
    %592 = vmatpush.msra.mxu0 %v63
    %593 = vmatpush.msra.mxu0 %v62
    %594 = vmatpush.msra.mxu0 %v61
    %595 = vmatpush.msra.mxu0 %v60
    %596 = vmatpush.msra.mxu0 %v59
    %597 = vmatpush.msra.mxu0 %v58
    %598 = vmatpush.msra.mxu0 %v57
    %599 = vmatpush.msra.mxu0 %v56
    %600 = vmatmul.f32.gmra.mxu0 %v581
    %v601 = vpop.f32.mrf.mxu0
    %v602 = vadd.f32 %v117, %v601
    %603 = vdwg.mxu0
    %604 = vmatpush.msra.mxu0 0.0
    %605 = vmatpush.msra.mxu0 0.0
    %606 = vmatpush.msra.mxu0 0.0
    %607 = vmatpush.msra.mxu0 0.0
    %608 = vmatpush.msra.mxu0 0.0
    %609 = vmatpush.msra.mxu0 0.0
    %610 = vmatpush.msra.mxu0 0.0
    %611 = vmatpush.msra.mxu0 0.0
    %612 = vmatpush.msra.mxu0 0.0
    %613 = vmatpush.msra.mxu0 0.0
    %614 = vmatpush.msra.mxu0 0.0
    %615 = vmatpush.msra.mxu0 0.0
    %616 = vmatpush.msra.mxu0 %v75
    %617 = vmatpush.msra.mxu0 %v74
    %618 = vmatpush.msra.mxu0 %v73
    %619 = vmatpush.msra.mxu0 %v72
    %620 = vmatmul.f32.gmra.mxu0 %v582
    %v621 = vpop.f32.mrf.mxu0
    %v622 = vadd.f32 %v602, %v621
    %623 = vdwg.mxu0
    %v624 = vxor.u32 %v622, 2147483648
    %v625 = vmul.f32 %v624, 1.442695
    %v626 = vpow.pop %v625
    %v627 = vadd.f32 %v626, 1.0
    %v628 = vrcp.pop %v627
    %v629 = vmul.f32 %v627, %v628
    %v630 = vsub.f32 1.0, %v629
    %v631 = vmul.f32 %v628, %v630
    %v632 = vadd.f32 %v628, %v631
    %vm633 = vweird.f32 %v627
    %vm634 = vweird.f32 %v628
    %vm635 = vmor %vm633, %vm634
    %v636 = vsel %vm635, %v628, %v632
    %v637 = vand.u32 2147483647, %v627
    %vm638 = vcmp.eq.f32.partialorder %v637, 8.507059e+37
    %v639 = vand.u32 %v627, 2147483648
    %v640 = vor.u32 1.1754944e-38, %v639
    %v641 = vsel %vm638, %v640, %v636
    %v642 = vmul.f32 1.0, %v641
    %v643 = vtanh.pop %v622
    %v644 = vsel %vm112, %v642, %v643
    %645 = vrot.lane.b32.xlu0 %v644, 32
    %v646 = vpop.permute.xlu0 %645
    %647 = vrot.lane.b32.xlu0 %v644, 64
    %v648 = vpop.permute.xlu0 %647
    %649 = vrot.lane.b32.xlu0 %v644, 96
    %v650 = vpop.permute.xlu0 %649
    %v651 = vmul.f32 %v650, %v500
    %v652 = vmul.f32 %v644, %v646
    %v653 = vadd.f32 %v651, %v652
    %v654 = vtanh.pop %v653
    %v655 = vmul.f32 %v648, %v654
    %656 = vmatpush.msra.mxu0 %v92
    %657 = vmatpush.msra.mxu0 %v91
    %658 = vmatpush.msra.mxu0 %v90
    %659 = vmatpush.msra.mxu0 %v89
    %660 = vmatpush.msra.mxu0 %v88
    %661 = vmatpush.msra.mxu0 %v87
    %662 = vmatpush.msra.mxu0 %v86
    %663 = vmatpush.msra.mxu0 %v85
    %664 = vmatpush.msra.mxu0 %v84
    %665 = vmatpush.msra.mxu0 %v83
    %666 = vmatpush.msra.mxu0 %v82
    %667 = vmatpush.msra.mxu0 %v81
    %668 = vmatpush.msra.mxu0 %v80
    %669 = vmatpush.msra.mxu0 %v79
    %670 = vmatpush.msra.mxu0 %v78
    %671 = vmatpush.msra.mxu0 %v77
    %672 = vmatmul.f32.gmra.mxu0 %v655
    %v673 = vpop.f32.mrf.mxu0
    %v674 = vadd.f32 %v195, %v673
    %675 = vdwg.mxu0
    %676 = vmatpush.msra.mxu0 %v108
    %677 = vmatpush.msra.mxu0 %v107
    %678 = vmatpush.msra.mxu0 %v106
    %679 = vmatpush.msra.mxu0 %v105
    %680 = vmatpush.msra.mxu0 %v104
    %681 = vmatpush.msra.mxu0 %v103
    %682 = vmatpush.msra.mxu0 %v102
    %683 = vmatpush.msra.mxu0 %v101
    %684 = vmatpush.msra.mxu0 %v100
    %685 = vmatpush.msra.mxu0 %v99
    %686 = vmatpush.msra.mxu0 %v98
    %687 = vmatpush.msra.mxu0 %v97
    %688 = vmatpush.msra.mxu0 %v96
    %689 = vmatpush.msra.mxu0 %v95
    %690 = vmatpush.msra.mxu0 %v94
    %691 = vmatpush.msra.mxu0 %v93
    %692 = vmatmul.f32.gmra.mxu0 %v574
    %v693 = vpop.f32.mrf.mxu0
    %v694 = vadd.f32 %v674, %v693
    %695 = vdwg.mxu0
    %v696 = vxor.u32 %v694, 2147483648
    %v697 = vmul.f32 %v696, 1.442695
    %v698 = vpow.pop %v697
    %v699 = vadd.f32 %v698, 1.0
    %v700 = vrcp.pop %v699
    %v701 = vmul.f32 %v699, %v700
    %v702 = vsub.f32 1.0, %v701
    %v703 = vmul.f32 %v700, %v702
    %v704 = vadd.f32 %v700, %v703
    %vm705 = vweird.f32 %v699
    %vm706 = vweird.f32 %v700
    %vm707 = vmor %vm705, %vm706
    %v708 = vsel %vm707, %v700, %v704
    %v709 = vand.u32 2147483647, %v699
    %vm710 = vcmp.eq.f32.partialorder %v709, 8.507059e+37
    %v711 = vand.u32 %v699, 2147483648
    %v712 = vor.u32 1.1754944e-38, %v711
    %v713 = vsel %vm710, %v712, %v708
    %v714 = vmul.f32 1.0, %v713
    %v715 = vtanh.pop %v694
    %v716 = vsel %vm112, %v714, %v715
    %717 = vrot.lane.b32.xlu0 %v716, 32
    %v718 = vpop.permute.xlu0 %717
    %719 = vrot.lane.b32.xlu0 %v716, 64
    %v720 = vpop.permute.xlu0 %719
    %721 = vrot.lane.b32.xlu0 %v716, 96
    %v722 = vpop.permute.xlu0 %721
    %v723 = vmul.f32 %v722, %v572
    %v724 = vmul.f32 %v716, %v718
    %v725 = vadd.f32 %v723, %v724
    %v726 = vtanh.pop %v725
    %v727 = vmul.f32 %v720, %v726
    %s728 = scalar_lea.vmem %s0, 8
    %v729 = vld [vmem:[%s728] sm:$0x3]
    %731 = vrot.lane.b32.xlu0 %v655, 32
    %v732 = vpop.permute.xlu0 %731
    %v734 = vsel %vm114, %v729, %v732
    %v735 = vsel %vm114, %v732, 0
    %737 = vmatpush.msra.mxu0 %v71
    %738 = vmatpush.msra.mxu0 %v70
    %739 = vmatpush.msra.mxu0 %v69
    %740 = vmatpush.msra.mxu0 %v68
    %741 = vmatpush.msra.mxu0 %v67
    %742 = vmatpush.msra.mxu0 %v66
    %743 = vmatpush.msra.mxu0 %v65
    %744 = vmatpush.msra.mxu0 %v64
    %745 = vmatpush.msra.mxu0 %v63
    %746 = vmatpush.msra.mxu0 %v62
    %747 = vmatpush.msra.mxu0 %v61
    %748 = vmatpush.msra.mxu0 %v60
    %749 = vmatpush.msra.mxu0 %v59
    %750 = vmatpush.msra.mxu0 %v58
    %751 = vmatpush.msra.mxu0 %v57
    %752 = vmatpush.msra.mxu0 %v56
    %753 = vmatmul.f32.gmra.mxu0 %v734
    %v754 = vpop.f32.mrf.mxu0
    %v755 = vadd.f32 %v117, %v754
    %756 = vdwg.mxu0
    %757 = vmatpush.msra.mxu0 0.0
    %758 = vmatpush.msra.mxu0 0.0
    %759 = vmatpush.msra.mxu0 0.0
    %760 = vmatpush.msra.mxu0 0.0
    %761 = vmatpush.msra.mxu0 0.0
    %762 = vmatpush.msra.mxu0 0.0
    %763 = vmatpush.msra.mxu0 0.0
    %764 = vmatpush.msra.mxu0 0.0
    %765 = vmatpush.msra.mxu0 0.0
    %766 = vmatpush.msra.mxu0 0.0
    %767 = vmatpush.msra.mxu0 0.0
    %768 = vmatpush.msra.mxu0 0.0
    %769 = vmatpush.msra.mxu0 %v75
    %770 = vmatpush.msra.mxu0 %v74
    %771 = vmatpush.msra.mxu0 %v73
    %772 = vmatpush.msra.mxu0 %v72
    %773 = vmatmul.f32.gmra.mxu0 %v735
    %v774 = vpop.f32.mrf.mxu0
    %v775 = vadd.f32 %v755, %v774
    %776 = vdwg.mxu0
    %v777 = vxor.u32 %v775, 2147483648
    %v778 = vmul.f32 %v777, 1.442695
    %v779 = vpow.pop %v778
    %v780 = vadd.f32 %v779, 1.0
    %v781 = vrcp.pop %v780
    %v782 = vmul.f32 %v780, %v781
    %v783 = vsub.f32 1.0, %v782
    %v784 = vmul.f32 %v781, %v783
    %v785 = vadd.f32 %v781, %v784
    %vm786 = vweird.f32 %v780
    %vm787 = vweird.f32 %v781
    %vm788 = vmor %vm786, %vm787
    %v789 = vsel %vm788, %v781, %v785
    %v790 = vand.u32 2147483647, %v780
    %vm791 = vcmp.eq.f32.partialorder %v790, 8.507059e+37
    %v792 = vand.u32 %v780, 2147483648
    %v793 = vor.u32 1.1754944e-38, %v792
    %v794 = vsel %vm791, %v793, %v789
    %v795 = vmul.f32 1.0, %v794
    %v796 = vtanh.pop %v775
    %v797 = vsel %vm112, %v795, %v796
    %798 = vrot.lane.b32.xlu0 %v797, 32
    %v799 = vpop.permute.xlu0 %798
    %800 = vrot.lane.b32.xlu0 %v797, 64
    %v801 = vpop.permute.xlu0 %800
    %802 = vrot.lane.b32.xlu0 %v797, 96
    %v803 = vpop.permute.xlu0 %802
    %v804 = vmul.f32 %v803, %v653
    %v805 = vmul.f32 %v797, %v799
    %v806 = vadd.f32 %v804, %v805
    %v807 = vtanh.pop %v806
    %v808 = vmul.f32 %v801, %v807
    %809 = vmatpush.msra.mxu0 %v92
    %810 = vmatpush.msra.mxu0 %v91
    %811 = vmatpush.msra.mxu0 %v90
    %812 = vmatpush.msra.mxu0 %v89
    %813 = vmatpush.msra.mxu0 %v88
    %814 = vmatpush.msra.mxu0 %v87
    %815 = vmatpush.msra.mxu0 %v86
    %816 = vmatpush.msra.mxu0 %v85
    %817 = vmatpush.msra.mxu0 %v84
    %818 = vmatpush.msra.mxu0 %v83
    %819 = vmatpush.msra.mxu0 %v82
    %820 = vmatpush.msra.mxu0 %v81
    %821 = vmatpush.msra.mxu0 %v80
    %822 = vmatpush.msra.mxu0 %v79
    %823 = vmatpush.msra.mxu0 %v78
    %824 = vmatpush.msra.mxu0 %v77
    %825 = vmatmul.f32.gmra.mxu0 %v808
    %v826 = vpop.f32.mrf.mxu0
    %v827 = vadd.f32 %v195, %v826
    %828 = vdwg.mxu0
    %829 = vmatpush.msra.mxu0 %v108
    %830 = vmatpush.msra.mxu0 %v107
    %831 = vmatpush.msra.mxu0 %v106
    %832 = vmatpush.msra.mxu0 %v105
    %833 = vmatpush.msra.mxu0 %v104
    %834 = vmatpush.msra.mxu0 %v103
    %835 = vmatpush.msra.mxu0 %v102
    %836 = vmatpush.msra.mxu0 %v101
    %837 = vmatpush.msra.mxu0 %v100
    %838 = vmatpush.msra.mxu0 %v99
    %839 = vmatpush.msra.mxu0 %v98
    %840 = vmatpush.msra.mxu0 %v97
    %841 = vmatpush.msra.mxu0 %v96
    %842 = vmatpush.msra.mxu0 %v95
    %843 = vmatpush.msra.mxu0 %v94
    %844 = vmatpush.msra.mxu0 %v93
    %845 = vmatmul.f32.gmra.mxu0 %v727
    %v846 = vpop.f32.mrf.mxu0
    %v847 = vadd.f32 %v827, %v846
    %848 = vdwg.mxu0
    %v849 = vxor.u32 %v847, 2147483648
    %v850 = vmul.f32 %v849, 1.442695
    %v851 = vpow.pop %v850
    %v852 = vadd.f32 %v851, 1.0
    %v853 = vrcp.pop %v852
    %v854 = vmul.f32 %v852, %v853
    %v855 = vsub.f32 1.0, %v854
    %v856 = vmul.f32 %v853, %v855
    %v857 = vadd.f32 %v853, %v856
    %vm858 = vweird.f32 %v852
    %vm859 = vweird.f32 %v853
    %vm860 = vmor %vm858, %vm859
    %v861 = vsel %vm860, %v853, %v857
    %v862 = vand.u32 2147483647, %v852
    %vm863 = vcmp.eq.f32.partialorder %v862, 8.507059e+37
    %v864 = vand.u32 %v852, 2147483648
    %v865 = vor.u32 1.1754944e-38, %v864
    %v866 = vsel %vm863, %v865, %v861
    %v867 = vmul.f32 1.0, %v866
    %v868 = vtanh.pop %v847
    %v869 = vsel %vm112, %v867, %v868
    %870 = vrot.lane.b32.xlu0 %v869, 32
    %v871 = vpop.permute.xlu0 %870
    %872 = vrot.lane.b32.xlu0 %v869, 64
    %v873 = vpop.permute.xlu0 %872
    %874 = vrot.lane.b32.xlu0 %v869, 96
    %v875 = vpop.permute.xlu0 %874
    %v876 = vmul.f32 %v875, %v725
    %v877 = vmul.f32 %v869, %v871
    %v878 = vadd.f32 %v876, %v877
    %v879 = vtanh.pop %v878
    %v880 = vmul.f32 %v873, %v879
    %s881 = scalar_lea.vmem %s0, 10
    %v882 = vld [vmem:[%s881] sm:$0x3]
    %884 = vrot.lane.b32.xlu0 %v808, 32
    %v885 = vpop.permute.xlu0 %884
    %v887 = vsel %vm114, %v882, %v885
    %v888 = vsel %vm114, %v885, 0
    %890 = vmatpush.msra.mxu0 %v71
    %891 = vmatpush.msra.mxu0 %v70
    %892 = vmatpush.msra.mxu0 %v69
    %893 = vmatpush.msra.mxu0 %v68
    %894 = vmatpush.msra.mxu0 %v67
    %895 = vmatpush.msra.mxu0 %v66
    %896 = vmatpush.msra.mxu0 %v65
    %897 = vmatpush.msra.mxu0 %v64
    %898 = vmatpush.msra.mxu0 %v63
    %899 = vmatpush.msra.mxu0 %v62
    %900 = vmatpush.msra.mxu0 %v61
    %901 = vmatpush.msra.mxu0 %v60
    %902 = vmatpush.msra.mxu0 %v59
    %903 = vmatpush.msra.mxu0 %v58
    %904 = vmatpush.msra.mxu0 %v57
    %905 = vmatpush.msra.mxu0 %v56
    %906 = vmatmul.f32.gmra.mxu0 %v887
    %v907 = vpop.f32.mrf.mxu0
    %v908 = vadd.f32 %v117, %v907
    %909 = vdwg.mxu0
    %910 = vmatpush.msra.mxu0 0.0
    %911 = vmatpush.msra.mxu0 0.0
    %912 = vmatpush.msra.mxu0 0.0
    %913 = vmatpush.msra.mxu0 0.0
    %914 = vmatpush.msra.mxu0 0.0
    %915 = vmatpush.msra.mxu0 0.0
    %916 = vmatpush.msra.mxu0 0.0
    %917 = vmatpush.msra.mxu0 0.0
    %918 = vmatpush.msra.mxu0 0.0
    %919 = vmatpush.msra.mxu0 0.0
    %920 = vmatpush.msra.mxu0 0.0
    %921 = vmatpush.msra.mxu0 0.0
    %922 = vmatpush.msra.mxu0 %v75
    %923 = vmatpush.msra.mxu0 %v74
    %924 = vmatpush.msra.mxu0 %v73
    %925 = vmatpush.msra.mxu0 %v72
    %926 = vmatmul.f32.gmra.mxu0 %v888
    %v927 = vpop.f32.mrf.mxu0
    %v928 = vadd.f32 %v908, %v927
    %929 = vdwg.mxu0
    %v930 = vxor.u32 %v928, 2147483648
    %v931 = vmul.f32 %v930, 1.442695
    %v932 = vpow.pop %v931
    %v933 = vadd.f32 %v932, 1.0
    %v934 = vrcp.pop %v933
    %v935 = vmul.f32 %v933, %v934
    %v936 = vsub.f32 1.0, %v935
    %v937 = vmul.f32 %v934, %v936
    %v938 = vadd.f32 %v934, %v937
    %vm939 = vweird.f32 %v933
    %vm940 = vweird.f32 %v934
    %vm941 = vmor %vm939, %vm940
    %v942 = vsel %vm941, %v934, %v938
    %v943 = vand.u32 2147483647, %v933
    %vm944 = vcmp.eq.f32.partialorder %v943, 8.507059e+37
    %v945 = vand.u32 %v933, 2147483648
    %v946 = vor.u32 1.1754944e-38, %v945
    %v947 = vsel %vm944, %v946, %v942
    %v948 = vmul.f32 1.0, %v947
    %v949 = vtanh.pop %v928
    %v950 = vsel %vm112, %v948, %v949
    %951 = vrot.lane.b32.xlu0 %v950, 32
    %v952 = vpop.permute.xlu0 %951
    %953 = vrot.lane.b32.xlu0 %v950, 64
    %v954 = vpop.permute.xlu0 %953
    %955 = vrot.lane.b32.xlu0 %v950, 96
    %v956 = vpop.permute.xlu0 %955
    %v957 = vmul.f32 %v956, %v806
    %v958 = vmul.f32 %v950, %v952
    %v959 = vadd.f32 %v957, %v958
    %v960 = vtanh.pop %v959
    %v961 = vmul.f32 %v954, %v960
    %962 = vmatpush.msra.mxu0 %v92
    %963 = vmatpush.msra.mxu0 %v91
    %964 = vmatpush.msra.mxu0 %v90
    %965 = vmatpush.msra.mxu0 %v89
    %966 = vmatpush.msra.mxu0 %v88
    %967 = vmatpush.msra.mxu0 %v87
    %968 = vmatpush.msra.mxu0 %v86
    %969 = vmatpush.msra.mxu0 %v85
    %970 = vmatpush.msra.mxu0 %v84
    %971 = vmatpush.msra.mxu0 %v83
    %972 = vmatpush.msra.mxu0 %v82
    %973 = vmatpush.msra.mxu0 %v81
    %974 = vmatpush.msra.mxu0 %v80
    %975 = vmatpush.msra.mxu0 %v79
    %976 = vmatpush.msra.mxu0 %v78
    %977 = vmatpush.msra.mxu0 %v77
    %978 = vmatmul.f32.gmra.mxu0 %v961
    %v979 = vpop.f32.mrf.mxu0
    %v980 = vadd.f32 %v195, %v979
    %981 = vdwg.mxu0
    %982 = vmatpush.msra.mxu0 %v108
    %983 = vmatpush.msra.mxu0 %v107
    %984 = vmatpush.msra.mxu0 %v106
    %985 = vmatpush.msra.mxu0 %v105
    %986 = vmatpush.msra.mxu0 %v104
    %987 = vmatpush.msra.mxu0 %v103
    %988 = vmatpush.msra.mxu0 %v102
    %989 = vmatpush.msra.mxu0 %v101
    %990 = vmatpush.msra.mxu0 %v100
    %991 = vmatpush.msra.mxu0 %v99
    %992 = vmatpush.msra.mxu0 %v98
    %993 = vmatpush.msra.mxu0 %v97
    %994 = vmatpush.msra.mxu0 %v96
    %995 = vmatpush.msra.mxu0 %v95
    %996 = vmatpush.msra.mxu0 %v94
    %997 = vmatpush.msra.mxu0 %v93
    %998 = vmatmul.f32.gmra.mxu0 %v880
    %v999 = vpop.f32.mrf.mxu0
    %v1000 = vadd.f32 %v980, %v999
    %1001 = vdwg.mxu0
    %v1002 = vxor.u32 %v1000, 2147483648
    %v1003 = vmul.f32 %v1002, 1.442695
    %v1004 = vpow.pop %v1003
    %v1005 = vadd.f32 %v1004, 1.0
    %v1006 = vrcp.pop %v1005
    %v1007 = vmul.f32 %v1005, %v1006
    %v1008 = vsub.f32 1.0, %v1007
    %v1009 = vmul.f32 %v1006, %v1008
    %v1010 = vadd.f32 %v1006, %v1009
    %vm1011 = vweird.f32 %v1005
    %vm1012 = vweird.f32 %v1006
    %vm1013 = vmor %vm1011, %vm1012
    %v1014 = vsel %vm1013, %v1006, %v1010
    %v1015 = vand.u32 2147483647, %v1005
    %vm1016 = vcmp.eq.f32.partialorder %v1015, 8.507059e+37
    %v1017 = vand.u32 %v1005, 2147483648
    %v1018 = vor.u32 1.1754944e-38, %v1017
    %v1019 = vsel %vm1016, %v1018, %v1014
    %v1020 = vmul.f32 1.0, %v1019
    %v1021 = vtanh.pop %v1000
    %v1022 = vsel %vm112, %v1020, %v1021
    %1023 = vrot.lane.b32.xlu0 %v1022, 32
    %v1024 = vpop.permute.xlu0 %1023
    %1025 = vrot.lane.b32.xlu0 %v1022, 64
    %v1026 = vpop.permute.xlu0 %1025
    %1027 = vrot.lane.b32.xlu0 %v1022, 96
    %v1028 = vpop.permute.xlu0 %1027
    %v1029 = vmul.f32 %v1028, %v878
    %v1030 = vmul.f32 %v1022, %v1024
    %v1031 = vadd.f32 %v1029, %v1030
    %v1032 = vtanh.pop %v1031
    %v1033 = vmul.f32 %v1026, %v1032
    %s1034 = scalar_lea.vmem %s0, 12
    %v1035 = vld [vmem:[%s1034] sm:$0x3]
    %1037 = vrot.lane.b32.xlu0 %v961, 32
    %v1038 = vpop.permute.xlu0 %1037
    %v1040 = vsel %vm114, %v1035, %v1038
    %v1041 = vsel %vm114, %v1038, 0
    %1043 = vmatpush.msra.mxu0 %v71
    %1044 = vmatpush.msra.mxu0 %v70
    %1045 = vmatpush.msra.mxu0 %v69
    %1046 = vmatpush.msra.mxu0 %v68
    %1047 = vmatpush.msra.mxu0 %v67
    %1048 = vmatpush.msra.mxu0 %v66
    %1049 = vmatpush.msra.mxu0 %v65
    %1050 = vmatpush.msra.mxu0 %v64
    %1051 = vmatpush.msra.mxu0 %v63
    %1052 = vmatpush.msra.mxu0 %v62
    %1053 = vmatpush.msra.mxu0 %v61
    %1054 = vmatpush.msra.mxu0 %v60
    %1055 = vmatpush.msra.mxu0 %v59
    %1056 = vmatpush.msra.mxu0 %v58
    %1057 = vmatpush.msra.mxu0 %v57
    %1058 = vmatpush.msra.mxu0 %v56
    %1059 = vmatmul.f32.gmra.mxu0 %v1040
    %v1060 = vpop.f32.mrf.mxu0
    %v1061 = vadd.f32 %v117, %v1060
    %1062 = vdwg.mxu0
    %1063 = vmatpush.msra.mxu0 0.0
    %1064 = vmatpush.msra.mxu0 0.0
    %1065 = vmatpush.msra.mxu0 0.0
    %1066 = vmatpush.msra.mxu0 0.0
    %1067 = vmatpush.msra.mxu0 0.0
    %1068 = vmatpush.msra.mxu0 0.0
    %1069 = vmatpush.msra.mxu0 0.0
    %1070 = vmatpush.msra.mxu0 0.0
    %1071 = vmatpush.msra.mxu0 0.0
    %1072 = vmatpush.msra.mxu0 0.0
    %1073 = vmatpush.msra.mxu0 0.0
    %1074 = vmatpush.msra.mxu0 0.0
    %1075 = vmatpush.msra.mxu0 %v75
    %1076 = vmatpush.msra.mxu0 %v74
    %1077 = vmatpush.msra.mxu0 %v73
    %1078 = vmatpush.msra.mxu0 %v72
    %1079 = vmatmul.f32.gmra.mxu0 %v1041
    %v1080 = vpop.f32.mrf.mxu0
    %v1081 = vadd.f32 %v1061, %v1080
    %1082 = vdwg.mxu0
    %v1083 = vxor.u32 %v1081, 2147483648
    %v1084 = vmul.f32 %v1083, 1.442695
    %v1085 = vpow.pop %v1084
    %v1086 = vadd.f32 %v1085, 1.0
    %v1087 = vrcp.pop %v1086
    %v1088 = vmul.f32 %v1086, %v1087
    %v1089 = vsub.f32 1.0, %v1088
    %v1090 = vmul.f32 %v1087, %v1089
    %v1091 = vadd.f32 %v1087, %v1090
    %vm1092 = vweird.f32 %v1086
    %vm1093 = vweird.f32 %v1087
    %vm1094 = vmor %vm1092, %vm1093
    %v1095 = vsel %vm1094, %v1087, %v1091
    %v1096 = vand.u32 2147483647, %v1086
    %vm1097 = vcmp.eq.f32.partialorder %v1096, 8.507059e+37
    %v1098 = vand.u32 %v1086, 2147483648
    %v1099 = vor.u32 1.1754944e-38, %v1098
    %v1100 = vsel %vm1097, %v1099, %v1095
    %v1101 = vmul.f32 1.0, %v1100
    %v1102 = vtanh.pop %v1081
    %v1103 = vsel %vm112, %v1101, %v1102
    %1104 = vrot.lane.b32.xlu0 %v1103, 32
    %v1105 = vpop.permute.xlu0 %1104
    %1106 = vrot.lane.b32.xlu0 %v1103, 64
    %v1107 = vpop.permute.xlu0 %1106
    %1108 = vrot.lane.b32.xlu0 %v1103, 96
    %v1109 = vpop.permute.xlu0 %1108
    %v1110 = vmul.f32 %v1109, %v959
    %v1111 = vmul.f32 %v1103, %v1105
    %v1112 = vadd.f32 %v1110, %v1111
    %v1113 = vtanh.pop %v1112
    %v1114 = vmul.f32 %v1107, %v1113
    %1115 = vmatpush.msra.mxu0 %v92
    %1116 = vmatpush.msra.mxu0 %v91
    %1117 = vmatpush.msra.mxu0 %v90
    %1118 = vmatpush.msra.mxu0 %v89
    %1119 = vmatpush.msra.mxu0 %v88
    %1120 = vmatpush.msra.mxu0 %v87
    %1121 = vmatpush.msra.mxu0 %v86
    %1122 = vmatpush.msra.mxu0 %v85
    %1123 = vmatpush.msra.mxu0 %v84
    %1124 = vmatpush.msra.mxu0 %v83
    %1125 = vmatpush.msra.mxu0 %v82
    %1126 = vmatpush.msra.mxu0 %v81
    %1127 = vmatpush.msra.mxu0 %v80
    %1128 = vmatpush.msra.mxu0 %v79
    %1129 = vmatpush.msra.mxu0 %v78
    %1130 = vmatpush.msra.mxu0 %v77
    %1131 = vmatmul.f32.gmra.mxu0 %v1114
    %v1132 = vpop.f32.mrf.mxu0
    %v1133 = vadd.f32 %v195, %v1132
    %1134 = vdwg.mxu0
    %1135 = vmatpush.msra.mxu0 %v108
    %1136 = vmatpush.msra.mxu0 %v107
    %1137 = vmatpush.msra.mxu0 %v106
    %1138 = vmatpush.msra.mxu0 %v105
    %1139 = vmatpush.msra.mxu0 %v104
    %1140 = vmatpush.msra.mxu0 %v103
    %1141 = vmatpush.msra.mxu0 %v102
    %1142 = vmatpush.msra.mxu0 %v101
    %1143 = vmatpush.msra.mxu0 %v100
    %1144 = vmatpush.msra.mxu0 %v99
    %1145 = vmatpush.msra.mxu0 %v98
    %1146 = vmatpush.msra.mxu0 %v97
    %1147 = vmatpush.msra.mxu0 %v96
    %1148 = vmatpush.msra.mxu0 %v95
    %1149 = vmatpush.msra.mxu0 %v94
    %1150 = vmatpush.msra.mxu0 %v93
    %1151 = vmatmul.f32.gmra.mxu0 %v1033
    %v1152 = vpop.f32.mrf.mxu0
    %v1153 = vadd.f32 %v1133, %v1152
    %1154 = vdwg.mxu0
    %v1155 = vxor.u32 %v1153, 2147483648
    %v1156 = vmul.f32 %v1155, 1.442695
    %v1157 = vpow.pop %v1156
    %v1158 = vadd.f32 %v1157, 1.0
    %v1159 = vrcp.pop %v1158
    %v1160 = vmul.f32 %v1158, %v1159
    %v1161 = vsub.f32 1.0, %v1160
    %v1162 = vmul.f32 %v1159, %v1161
    %v1163 = vadd.f32 %v1159, %v1162
    %vm1164 = vweird.f32 %v1158
    %vm1165 = vweird.f32 %v1159
    %vm1166 = vmor %vm1164, %vm1165
    %v1167 = vsel %vm1166, %v1159, %v1163
    %v1168 = vand.u32 2147483647, %v1158
    %vm1169 = vcmp.eq.f32.partialorder %v1168, 8.507059e+37
    %v1170 = vand.u32 %v1158, 2147483648
    %v1171 = vor.u32 1.1754944e-38, %v1170
    %v1172 = vsel %vm1169, %v1171, %v1167
    %v1173 = vmul.f32 1.0, %v1172
    %v1174 = vtanh.pop %v1153
    %v1175 = vsel %vm112, %v1173, %v1174
    %1176 = vrot.lane.b32.xlu0 %v1175, 32
    %v1177 = vpop.permute.xlu0 %1176
    %1178 = vrot.lane.b32.xlu0 %v1175, 64
    %v1179 = vpop.permute.xlu0 %1178
    %1180 = vrot.lane.b32.xlu0 %v1175, 96
    %v1181 = vpop.permute.xlu0 %1180
    %v1182 = vmul.f32 %v1181, %v1031
    %v1183 = vmul.f32 %v1175, %v1177
    %v1184 = vadd.f32 %v1182, %v1183
    %v1185 = vtanh.pop %v1184
    %v1186 = vmul.f32 %v1179, %v1185
    %s1187 = scalar_lea.vmem %s0, 14
    %v1188 = vld [vmem:[%s1187] sm:$0x3]
    %1190 = vrot.lane.b32.xlu0 %v1114, 32
    %v1191 = vpop.permute.xlu0 %1190
    %v1193 = vsel %vm114, %v1188, %v1191
    %v1194 = vsel %vm114, %v1191, 0
    %1196 = vmatpush.msra.mxu0 %v71
    %1197 = vmatpush.msra.mxu0 %v70
    %1198 = vmatpush.msra.mxu0 %v69
    %1199 = vmatpush.msra.mxu0 %v68
    %1200 = vmatpush.msra.mxu0 %v67
    %1201 = vmatpush.msra.mxu0 %v66
    %1202 = vmatpush.msra.mxu0 %v65
    %1203 = vmatpush.msra.mxu0 %v64
    %1204 = vmatpush.msra.mxu0 %v63
    %1205 = vmatpush.msra.mxu0 %v62
    %1206 = vmatpush.msra.mxu0 %v61
    %1207 = vmatpush.msra.mxu0 %v60
    %1208 = vmatpush.msra.mxu0 %v59
    %1209 = vmatpush.msra.mxu0 %v58
    %1210 = vmatpush.msra.mxu0 %v57
    %1211 = vmatpush.msra.mxu0 %v56
    %1212 = vmatmul.f32.gmra.mxu0 %v1193
    %v1213 = vpop.f32.mrf.mxu0
    %v1214 = vadd.f32 %v117, %v1213
    %1215 = vdwg.mxu0
    %1216 = vmatpush.msra.mxu0 0.0
    %1217 = vmatpush.msra.mxu0 0.0
    %1218 = vmatpush.msra.mxu0 0.0
    %1219 = vmatpush.msra.mxu0 0.0
    %1220 = vmatpush.msra.mxu0 0.0
    %1221 = vmatpush.msra.mxu0 0.0
    %1222 = vmatpush.msra.mxu0 0.0
    %1223 = vmatpush.msra.mxu0 0.0
    %1224 = vmatpush.msra.mxu0 0.0
    %1225 = vmatpush.msra.mxu0 0.0
    %1226 = vmatpush.msra.mxu0 0.0
    %1227 = vmatpush.msra.mxu0 0.0
    %1228 = vmatpush.msra.mxu0 %v75
    %1229 = vmatpush.msra.mxu0 %v74
    %1230 = vmatpush.msra.mxu0 %v73
    %1231 = vmatpush.msra.mxu0 %v72
    %1232 = vmatmul.f32.gmra.mxu0 %v1194
    %v1233 = vpop.f32.mrf.mxu0
    %v1234 = vadd.f32 %v1214, %v1233
    %1235 = vdwg.mxu0
    %v1236 = vxor.u32 %v1234, 2147483648
    %v1237 = vmul.f32 %v1236, 1.442695
    %v1238 = vpow.pop %v1237
    %v1239 = vadd.f32 %v1238, 1.0
    %v1240 = vrcp.pop %v1239
    %v1241 = vmul.f32 %v1239, %v1240
    %v1242 = vsub.f32 1.0, %v1241
    %v1243 = vmul.f32 %v1240, %v1242
    %v1244 = vadd.f32 %v1240, %v1243
    %vm1245 = vweird.f32 %v1239
    %vm1246 = vweird.f32 %v1240
    %vm1247 = vmor %vm1245, %vm1246
    %v1248 = vsel %vm1247, %v1240, %v1244
    %v1249 = vand.u32 2147483647, %v1239
    %vm1250 = vcmp.eq.f32.partialorder %v1249, 8.507059e+37
    %v1251 = vand.u32 %v1239, 2147483648
    %v1252 = vor.u32 1.1754944e-38, %v1251
    %v1253 = vsel %vm1250, %v1252, %v1248
    %v1254 = vmul.f32 1.0, %v1253
    %v1255 = vtanh.pop %v1234
    %v1256 = vsel %vm112, %v1254, %v1255
    %1257 = vrot.lane.b32.xlu0 %v1256, 32
    %v1258 = vpop.permute.xlu0 %1257
    %1259 = vrot.lane.b32.xlu0 %v1256, 64
    %v1260 = vpop.permute.xlu0 %1259
    %1261 = vrot.lane.b32.xlu0 %v1256, 96
    %v1262 = vpop.permute.xlu0 %1261
    %v1263 = vmul.f32 %v1262, %v1112
    %v1264 = vmul.f32 %v1256, %v1258
    %v1265 = vadd.f32 %v1263, %v1264
    %v1266 = vtanh.pop %v1265
    %v1267 = vmul.f32 %v1260, %v1266
    %1268 = vmatpush.msra.mxu0 %v92
    %1269 = vmatpush.msra.mxu0 %v91
    %1270 = vmatpush.msra.mxu0 %v90
    %1271 = vmatpush.msra.mxu0 %v89
    %1272 = vmatpush.msra.mxu0 %v88
    %1273 = vmatpush.msra.mxu0 %v87
    %1274 = vmatpush.msra.mxu0 %v86
    %1275 = vmatpush.msra.mxu0 %v85
    %1276 = vmatpush.msra.mxu0 %v84
    %1277 = vmatpush.msra.mxu0 %v83
    %1278 = vmatpush.msra.mxu0 %v82
    %1279 = vmatpush.msra.mxu0 %v81
    %1280 = vmatpush.msra.mxu0 %v80
    %1281 = vmatpush.msra.mxu0 %v79
    %1282 = vmatpush.msra.mxu0 %v78
    %1283 = vmatpush.msra.mxu0 %v77
    %1284 = vmatmul.f32.gmra.mxu0 %v1267
    %v1285 = vpop.f32.mrf.mxu0
    %v1286 = vadd.f32 %v195, %v1285
    %1287 = vdwg.mxu0
    %1288 = vmatpush.msra.mxu0 %v108
    %1289 = vmatpush.msra.mxu0 %v107
    %1290 = vmatpush.msra.mxu0 %v106
    %1291 = vmatpush.msra.mxu0 %v105
    %1292 = vmatpush.msra.mxu0 %v104
    %1293 = vmatpush.msra.mxu0 %v103
    %1294 = vmatpush.msra.mxu0 %v102
    %1295 = vmatpush.msra.mxu0 %v101
    %1296 = vmatpush.msra.mxu0 %v100
    %1297 = vmatpush.msra.mxu0 %v99
    %1298 = vmatpush.msra.mxu0 %v98
    %1299 = vmatpush.msra.mxu0 %v97
    %1300 = vmatpush.msra.mxu0 %v96
    %1301 = vmatpush.msra.mxu0 %v95
    %1302 = vmatpush.msra.mxu0 %v94
    %1303 = vmatpush.msra.mxu0 %v93
    %1304 = vmatmul.f32.gmra.mxu0 %v1186
    %v1305 = vpop.f32.mrf.mxu0
    %v1306 = vadd.f32 %v1286, %v1305
    %1307 = vdwg.mxu0
    %v1308 = vxor.u32 %v1306, 2147483648
    %v1309 = vmul.f32 %v1308, 1.442695
    %v1310 = vpow.pop %v1309
    %v1311 = vadd.f32 %v1310, 1.0
    %v1312 = vrcp.pop %v1311
    %v1313 = vmul.f32 %v1311, %v1312
    %v1314 = vsub.f32 1.0, %v1313
    %v1315 = vmul.f32 %v1312, %v1314
    %v1316 = vadd.f32 %v1312, %v1315
    %vm1317 = vweird.f32 %v1311
    %vm1318 = vweird.f32 %v1312
    %vm1319 = vmor %vm1317, %vm1318
    %v1320 = vsel %vm1319, %v1312, %v1316
    %v1321 = vand.u32 2147483647, %v1311
    %vm1322 = vcmp.eq.f32.partialorder %v1321, 8.507059e+37
    %v1323 = vand.u32 %v1311, 2147483648
    %v1324 = vor.u32 1.1754944e-38, %v1323
    %v1325 = vsel %vm1322, %v1324, %v1320
    %v1326 = vmul.f32 1.0, %v1325
    %v1327 = vtanh.pop %v1306
    %v1328 = vsel %vm112, %v1326, %v1327
    %1329 = vrot.lane.b32.xlu0 %v1328, 32
    %v1330 = vpop.permute.xlu0 %1329
    %1331 = vrot.lane.b32.xlu0 %v1328, 64
    %v1332 = vpop.permute.xlu0 %1331
    %1333 = vrot.lane.b32.xlu0 %v1328, 96
    %v1334 = vpop.permute.xlu0 %1333
    %v1335 = vmul.f32 %v1334, %v1184
    %v1336 = vmul.f32 %v1328, %v1330
    %v1337 = vadd.f32 %v1335, %v1336
    %v1338 = vtanh.pop %v1337
    %v1339 = vmul.f32 %v1332, %v1338
    %vm1340 = vcmask 254976
    %1341 = vst.msk [vmem:[#allocation7] sm:$0x3] %vm1340, %v1267
    %s1342 = scalar_lea.vmem [#allocation7], 2
    %1343 = vst.msk [vmem:[%s1342] sm:$0x3] %vm1340, %v1339
    %1344 = vst.msk [vmem:[#allocation8] sm:$0x3] %vm1340, %v1265
    %s1345 = scalar_lea.vmem [#allocation8], 2
    %1346 = vst.msk [vmem:[%s1345] sm:$0x3] %vm1340, %v1337
    // Predicated region
    $region30: #{encoder_forward.1} parent=1 // pred_check
      _
    $region31: #{encoder_forward.1} parent=1 // pred_check_branch
      %1348 = sbr.rel (0) target = $region33
    $region32: #{encoder_forward.1} parent=1 // pred_region
      %1350 = vsyncadd [#allocation4], 0
      %s1351 = sshll.u32 [#allocation7], 4
      %s1352 = int_to_ptr.vmem [resolvable:$true] %s1351
      %s1353 = sshll.u32 %s5, 4
      %s1354 = int_to_ptr.hbm [resolvable:$true] %s1353
      %1359 = dma.vmem_to_hbm [thread:$0]  %s1352, 64, %s1354, [#allocation4], 32, 32, 2
    $region33: #{encoder_forward.1} parent=1 // pred_fallthru
      _
    // Predicated region
    $region34: #{encoder_forward.1} parent=1 // pred_check
      _
    $region35: #{encoder_forward.1} parent=1 // pred_check_branch
      %1361 = sbr.rel (0) target = $region37
    $region36: #{encoder_forward.1} parent=1 // pred_region
      %1363 = vsyncadd [#allocation9], 0
      %s1364 = sshll.u32 [#allocation8], 4
      %s1365 = int_to_ptr.vmem [resolvable:$true] %s1364
      %s1366 = sshll.u32 %s6, 4
      %s1367 = int_to_ptr.hbm [resolvable:$true] %s1366
      %1372 = dma.vmem_to_hbm [thread:$0]  %s1365, 64, %s1367, [#allocation9], 32, 32, 2
    $region37: #{encoder_forward.1} parent=1 // pred_fallthru
      _
    // Predicated region
    $region38: #{encoder_forward.1} parent=1 // pred_check
      _
    $region39: #{encoder_forward.1} parent=1 // pred_check_branch
      %1374 = sbr.rel (0) target = $region41
    $region40: #{encoder_forward.1} parent=1 // pred_region
      %1376 = dma.done [#allocation4], 64
    $region41: #{encoder_forward.1} parent=1 // pred_fallthru
      _
    // Predicated region
    $region42: #{encoder_forward.1} parent=1 // pred_check
      _
    $region43: #{encoder_forward.1} parent=1 // pred_check_branch
      %1378 = sbr.rel (0) target = $region45
    $region44: #{encoder_forward.1} parent=1 // pred_region
      %1380 = dma.done [#allocation9], 64
    $region45: #{encoder_forward.1} parent=1 // pred_fallthru
      _
    %1381 = vsyncpa [#allocation3], 1
    %1382 = vsyncpa [#allocation6], 1
    %1383 = vsyncpa [#allocation4], 1
    %1384 = vsyncpa [#allocation9], 1

</llo_original>
